<compile_context>
chip_gen: v7x
topology: tpu7x:2x2x1
jax: 0.10.0
libtpu: 0.0.40
codegen_flags: <defaults>
</compile_context>

<pallas_src>
import numpy as np
import jax
import jax.numpy as jnp
from jax.experimental import pallas as pl
from jax.experimental.pallas import tpu as pltpu


# ----------------------------------------------------------------------------
# Pallas kernel: one batch element per grid step, everything lane-dense.
# ----------------------------------------------------------------------------
def _ffb_kernel(x0_ref, x1_ref, w_ref, b_ref, rh_ref, rwk_ref, o_ref, pad_ref):
    # x0_ref / x1_ref : (1, H, W*C)        lane-dense inputs
    # w_ref           : (4, 3, W*C, W*C)   banded conv weights [conv, kh, :, :]
    # b_ref           : (4, 1, W*C)        lane-tiled biases
    # rh_ref          : (2H, H)            row-upsample matrix (align_corners)
    # rwk_ref         : (W*C, 2*W*C)       kron(rw.T, I_C) column-upsample matrix
    # o_ref           : (1, 2H, 2*W*C)     lane-dense output
    # pad_ref         : VMEM (H+2, W*C)    scratch: x with one zero row above/below
    _, H, WC = x1_ref.shape

    # Zero only the 1-row top/bottom border once per grid step; the interior
    # is fully overwritten by every conv3x3 call.
    pad_ref[0:1, :] = jnp.zeros((1, WC), jnp.float32)
    pad_ref[H + 1:H + 2, :] = jnp.zeros((1, WC), jnp.float32)

    def conv3x3(x_ld, idx):
        # 3x3 conv, padding=1: three (H, W*C) @ (W*C, W*C) matmuls, one per kh.
        # kw shifts and Cin->Cout mixing live inside the banded weights.
        pad_ref[1:H + 1, :] = x_ld
        acc = jnp.dot(pad_ref[0:H, :], w_ref[idx, 0],
                      preferred_element_type=jnp.float32)
        acc = acc + jnp.dot(pad_ref[1:H + 1, :], w_ref[idx, 1],
                            preferred_element_type=jnp.float32)
        acc = acc + jnp.dot(pad_ref[2:H + 2, :], w_ref[idx, 2],
                            preferred_element_type=jnp.float32)
        return acc + b_ref[idx]                              # (H, W*C)

    def rcu(x, i0, i1):
        out = jnp.maximum(x, 0.0)
        out = conv3x3(out, i0)
        out = jnp.maximum(out, 0.0)
        out = conv3x3(out, i1)
        return out + x

    x0 = x0_ref[0].astype(jnp.float32)                       # (H, W*C)
    x1 = x1_ref[0].astype(jnp.float32)

    s = x0 + rcu(x1, 0, 1)        # output = xs[0] + resConfUnit1(xs[1])
    s = rcu(s, 2, 3)              # output = resConfUnit2(output)

    # bilinear x2 upsample (align_corners=True) as two lane-dense matmuls
    t = jnp.dot(rh_ref[...], s, preferred_element_type=jnp.float32)   # (2H, W*C)
    u = jnp.dot(t, rwk_ref[...], preferred_element_type=jnp.float32)  # (2H, 2W*C)
    o_ref[0] = u.astype(o_ref.dtype)


# ----------------------------------------------------------------------------
# Wrapper (NCHW in / NCHW out, like the PyTorch module)
# ----------------------------------------------------------------------------
def feature_fusion_block(x0_nchw, x1_nchw, params):
    B, C, H, W = x0_nchw.shape
    WC = W * C
    Ho, Wo = 2 * H, 2 * W

    # NCHW -> lane-dense (B, H, W*C)
    def to_ld(x):
        return jnp.transpose(x, (0, 2, 3, 1)).reshape(B, H, WC)

    x0 = to_ld(x0_nchw)
    x1 = to_ld(x1_nchw)

    # torch conv weight (Cout, Cin, 3, 3) -> 3 banded (W*C, W*C) matrices.
    # Wb_kh[v*C + cin, w*C + cout] = wt[cout, cin, kh, kw] with v = w + kw - 1.
    def banded(wt):
        mats = []
        for kh in range(3):
            m = jnp.zeros((WC, WC), jnp.float32)
            for kw in range(3):
                sel = jnp.eye(W, k=1 - kw, dtype=jnp.float32)  # sel[v,w]=1 iff v=w+kw-1
                m = m + jnp.kron(sel, wt[:, :, kh, kw].T)
            mats.append(m)
        return jnp.stack(mats)                                 # (3, WC, WC)

    w_all = jnp.stack([banded(params['w1a']), banded(params['w1b']),
                       banded(params['w2a']), banded(params['w2b'])])  # (4,3,WC,WC)
    b_all = jnp.stack([jnp.tile(params[k], (W,)) for k in
                       ('b1a', 'b1b', 'b2a', 'b2b')]).reshape(4, 1, WC)

    rh = jnp.asarray(_interp_matrix(H), jnp.float32)           # (2H, H)
    rw = jnp.asarray(_interp_matrix(W), jnp.float32)           # (2W, W)
    rwk = jnp.kron(rw.T, jnp.eye(C, dtype=jnp.float32))        # (W*C, 2W*C)

    grid_spec = pltpu.PrefetchScalarGridSpec(
        num_scalar_prefetch=0,
        grid=(B,),
        in_specs=[
            pl.BlockSpec((1, H, WC), lambda b: (b, 0, 0)),           # x0
            pl.BlockSpec((1, H, WC), lambda b: (b, 0, 0)),           # x1
            pl.BlockSpec((4, 3, WC, WC), lambda b: (0, 0, 0, 0)),    # banded weights
            pl.BlockSpec((4, 1, WC), lambda b: (0, 0, 0)),           # biases
            pl.BlockSpec((Ho, H), lambda b: (0, 0)),                 # rh
            pl.BlockSpec((WC, Wo * C), lambda b: (0, 0)),            # kron(rw.T, I_C)
        ],
        out_specs=pl.BlockSpec((1, Ho, Wo * C), lambda b: (b, 0, 0)),
        scratch_shapes=[pltpu.VMEM((H + 2, WC), jnp.float32)],
    )

    out_ld = pl.pallas_call(
        _ffb_kernel,
        out_shape=jax.ShapeDtypeStruct((B, Ho, Wo * C), jnp.float32),
        grid_spec=grid_spec,
        compiler_params=pltpu.CompilerParams(
            dimension_semantics=("parallel",),
            vmem_limit_bytes=32 * 1024 * 1024,
        ),
    )(x0, x1, w_all, b_all, rh, rwk)

    # (B, 2H, 2W*C) -> NCHW (B, C, 2H, 2W)
    return jnp.transpose(out_ld.reshape(B, Ho, Wo, C), (0, 3, 1, 2))


# ----------------------------------------------------------------------------
# Helpers: bilinear (align_corners=True) matrix, params, pure-JAX reference
# ----------------------------------------------------------------------------
def _interp_matrix(n_in, scale=2):
    n_out = n_in * scale
    src = np.arange(n_out, dtype=np.float64) * (n_in - 1) / (n_out - 1)
    i0 = np.clip(np.floor(src).astype(np.int64), 0, n_in - 1)
    i1 = np.minimum(i0 + 1, n_in - 1)
    w1 = src - i0
    w0 = 1.0 - w1
    m = np.zeros((n_out, n_in), np.float64)
    m[np.arange(n_out), i0] += w0
    m[np.arange(n_out), i1] += w1
    return m.astype(np.float32)


def _init_params(key, features):
    names = ['w1a', 'b1a', 'w1b', 'b1b', 'w2a', 'b2a', 'w2b', 'b2b']
    keys = jax.random.split(key, len(names))
    params = {}
    for name, k in zip(names, keys):
        if name.startswith('w'):
            params[name] = 0.1 * jax.random.normal(
                k, (features, features, 3, 3), jnp.float32)   # OIHW (torch)
        else:
            params[name] = 0.1 * jax.random.normal(k, (features,), jnp.float32)
    return params


def _reference(x0, x1, params):
    def conv(x, w, b):
        y = jax.lax.conv_general_dilated(
            x, w, window_strides=(1, 1), padding=((1, 1), (1, 1)),
            dimension_numbers=('NCHW', 'OIHW', 'NCHW'))
        return y + b.reshape(1, -1, 1, 1)

    def rcu(x, wa, ba, wb, bb):
        out = jnp.maximum(x, 0.0)
        out = conv(out, wa, ba)
        out = jnp.maximum(out, 0.0)
        out = conv(out, wb, bb)
        return out + x

    s = x0 + rcu(x1, params['w1a'], params['b1a'], params['w1b'], params['b1b'])
    s = rcu(s, params['w2a'], params['b2a'], params['w2b'], params['b2b'])

    H, W = s.shape[2], s.shape[3]
    rh = jnp.asarray(_interp_matrix(H), jnp.float32)
    rw = jnp.asarray(_interp_matrix(W), jnp.float32)
    t = jnp.einsum('oh,nchw->ncow', rh, s)
    return jnp.einsum('pw,ncow->ncop', rw, t)


# ----------------------------------------------------------------------------
if __name__ == "__main__":
    B, C, H, W = 2, 8, 16, 16          # features=8, spatial 16x16 (W*C = 128)
    key = jax.random.PRNGKey(0)
    k0, k1, kp = jax.random.split(key, 3)

    x0 = jax.random.normal(k0, (B, C, H, W), jnp.float32)   # xs[0]
    x1 = jax.random.normal(k1, (B, C, H, W), jnp.float32)   # xs[1]
    params = _init_params(kp, C)

    out = feature_fusion_block(x0, x1, params)
    out = jax.block_until_ready(out)

    ref = _reference(x0, x1, params)
    assert out.shape == (B, C, 2 * H, 2 * W), out.shape
    np.testing.assert_allclose(np.asarray(out), np.asarray(ref),
                               rtol=1e-4, atol=1e-4)

    print("KERNEL_OK")
</pallas_src>

<mosaic_0001>
module attributes {stable_mosaic.version = 11 : i64} {
  func.func @_ffb_kernel(%arg0: i32, %arg1: memref<1x16x128xf32, #tpu.memory_space<vmem>>, %arg2: memref<1x16x128xf32, #tpu.memory_space<vmem>>, %arg3: memref<4x3x128x128xf32, #tpu.memory_space<vmem>>, %arg4: memref<4x1x128xf32, #tpu.memory_space<vmem>>, %arg5: memref<32x16xf32, #tpu.memory_space<vmem>>, %arg6: memref<128x256xf32, #tpu.memory_space<vmem>>, %arg7: memref<1x32x256xf32, #tpu.memory_space<vmem>>, %arg8: memref<18x128xf32, #tpu.memory_space<vmem>>) attributes {dimension_semantics = [#tpu.dimension_semantics<parallel>], iteration_bounds = array<i64: 2>, scalar_prefetch = 0 : i64, scratch_operands = 1 : i64, tpu.core_type = #tpu.core_type<tc>, window_params = [{transform_indices = @transform_0, window_bounds = array<i64: 1, 16, 128>}, {transform_indices = @transform_1, window_bounds = array<i64: 1, 16, 128>}, {pipeline_mode = #tpu.pipeline_mode<synchronous>, transform_indices = @transform_2, window_bounds = array<i64: 4, 3, 128, 128>}, {pipeline_mode = #tpu.pipeline_mode<synchronous>, transform_indices = @transform_3, window_bounds = array<i64: 4, 1, 128>}, {pipeline_mode = #tpu.pipeline_mode<synchronous>, transform_indices = @transform_4, window_bounds = array<i64: 32, 16>}, {pipeline_mode = #tpu.pipeline_mode<synchronous>, transform_indices = @transform_5, window_bounds = array<i64: 128, 256>}, {transform_indices = @transform_6, window_bounds = array<i64: 1, 32, 256>}]} {
    %cst = arith.constant 0.000000e+00 : f32
    %0 = vector.broadcast %cst : f32 to vector<1x128xf32>
    %c0 = arith.constant 0 : index
    %c0_0 = arith.constant 0 : index
    %1 = vector.load %arg8[%c0, %c0_0] : memref<18x128xf32, #tpu.memory_space<vmem>>, vector<1x128xf32>
    tpu.vector_store %arg8[%c0, %c0_0], %0 {strides = array<i32>} : memref<18x128xf32, #tpu.memory_space<vmem>>, vector<1x128xf32>,
    %cst_1 = arith.constant 0.000000e+00 : f32
    %2 = vector.broadcast %cst_1 : f32 to vector<1x128xf32>
    %c17 = arith.constant 17 : index
    %c0_2 = arith.constant 0 : index
    %3 = vector.load %arg8[%c17, %c0_2] : memref<18x128xf32, #tpu.memory_space<vmem>>, vector<1x128xf32>
    tpu.vector_store %arg8[%c17, %c0_2], %2 {strides = array<i32>} : memref<18x128xf32, #tpu.memory_space<vmem>>, vector<1x128xf32>,
    %c0_3 = arith.constant 0 : index
    %c0_4 = arith.constant 0 : index
    %c0_5 = arith.constant 0 : index
    %4 = vector.load %arg1[%c0_3, %c0_4, %c0_5] : memref<1x16x128xf32, #tpu.memory_space<vmem>>, vector<1x16x128xf32>
    %5 = vector.shape_cast %4 : vector<1x16x128xf32> to vector<16x128xf32>
    %c0_6 = arith.constant 0 : index
    %c0_7 = arith.constant 0 : index
    %c0_8 = arith.constant 0 : index
    %6 = vector.load %arg2[%c0_6, %c0_7, %c0_8] : memref<1x16x128xf32, #tpu.memory_space<vmem>>, vector<1x16x128xf32>
    %7 = vector.shape_cast %6 : vector<1x16x128xf32> to vector<16x128xf32>
    %cst_9 = arith.constant 0.000000e+00 : f32
    %8 = vector.broadcast %cst_9 : f32 to vector<16x128xf32>
    %9 = arith.maximumf %7, %8 : vector<16x128xf32>
    %c1 = arith.constant 1 : index
    %c0_10 = arith.constant 0 : index
    %10 = vector.load %arg8[%c1, %c0_10] : memref<18x128xf32, #tpu.memory_space<vmem>>, vector<16x128xf32>
    tpu.vector_store %arg8[%c1, %c0_10], %9 {strides = array<i32>} : memref<18x128xf32, #tpu.memory_space<vmem>>, vector<16x128xf32>,
    %c0_11 = arith.constant 0 : index
    %c0_12 = arith.constant 0 : index
    %11 = vector.load %arg8[%c0_11, %c0_12] : memref<18x128xf32, #tpu.memory_space<vmem>>, vector<16x128xf32>
    %c0_13 = arith.constant 0 : index
    %c0_14 = arith.constant 0 : index
    %c0_15 = arith.constant 0 : index
    %c0_16 = arith.constant 0 : index
    %12 = vector.load %arg3[%c0_13, %c0_14, %c0_15, %c0_16] : memref<4x3x128x128xf32, #tpu.memory_space<vmem>>, vector<1x1x128x128xf32>
    %13 = vector.shape_cast %12 : vector<1x1x128x128xf32> to vector<128x128xf32>
    %cst_17 = arith.constant dense<0.000000e+00> : vector<16x128xf32>
    %14 = tpu.matmul %11, %13, %cst_17 {dimension_numbers = #tpu.dot_dimension_numbers<[1], [0], [0], [1], [0, 0, 1, 1], [], []>} : vector<16x128xf32>, vector<128x128xf32>, vector<16x128xf32> -> vector<16x128xf32>
    %c1_18 = arith.constant 1 : index
    %c0_19 = arith.constant 0 : index
    %15 = vector.load %arg8[%c1_18, %c0_19] : memref<18x128xf32, #tpu.memory_space<vmem>>, vector<16x128xf32>
    %c0_20 = arith.constant 0 : index
    %c1_21 = arith.constant 1 : index
    %c0_22 = arith.constant 0 : index
    %c0_23 = arith.constant 0 : index
    %16 = vector.load %arg3[%c0_20, %c1_21, %c0_22, %c0_23] : memref<4x3x128x128xf32, #tpu.memory_space<vmem>>, vector<1x1x128x128xf32>
    %17 = vector.shape_cast %16 : vector<1x1x128x128xf32> to vector<128x128xf32>
    %cst_24 = arith.constant dense<0.000000e+00> : vector<16x128xf32>
    %18 = tpu.matmul %15, %17, %cst_24 {dimension_numbers = #tpu.dot_dimension_numbers<[1], [0], [0], [1], [0, 0, 1, 1], [], []>} : vector<16x128xf32>, vector<128x128xf32>, vector<16x128xf32> -> vector<16x128xf32>
    %19 = arith.addf %14, %18 : vector<16x128xf32>
    %c2 = arith.constant 2 : index
    %c0_25 = arith.constant 0 : index
    %20 = vector.load %arg8[%c2, %c0_25] : memref<18x128xf32, #tpu.memory_space<vmem>>, vector<16x128xf32>
    %c0_26 = arith.constant 0 : index
    %c2_27 = arith.constant 2 : index
    %c0_28 = arith.constant 0 : index
    %c0_29 = arith.constant 0 : index
    %21 = vector.load %arg3[%c0_26, %c2_27, %c0_28, %c0_29] : memref<4x3x128x128xf32, #tpu.memory_space<vmem>>, vector<1x1x128x128xf32>
    %22 = vector.shape_cast %21 : vector<1x1x128x128xf32> to vector<128x128xf32>
    %cst_30 = arith.constant dense<0.000000e+00> : vector<16x128xf32>
    %23 = tpu.matmul %20, %22, %cst_30 {dimension_numbers = #tpu.dot_dimension_numbers<[1], [0], [0], [1], [0, 0, 1, 1], [], []>} : vector<16x128xf32>, vector<128x128xf32>, vector<16x128xf32> -> vector<16x128xf32>
    %24 = arith.addf %19, %23 : vector<16x128xf32>
    %c0_31 = arith.constant 0 : index
    %c0_32 = arith.constant 0 : index
    %c0_33 = arith.constant 0 : index
    %25 = vector.load %arg4[%c0_31, %c0_32, %c0_33] : memref<4x1x128xf32, #tpu.memory_space<vmem>>, vector<1x1x128xf32>
    %26 = vector.shape_cast %25 : vector<1x1x128xf32> to vector<1x128xf32>
    %27 = vector.broadcast %26 : vector<1x128xf32> to vector<16x128xf32>
    %28 = arith.addf %24, %27 : vector<16x128xf32>
    %cst_34 = arith.constant 0.000000e+00 : f32
    %29 = vector.broadcast %cst_34 : f32 to vector<16x128xf32>
    %30 = arith.maximumf %28, %29 : vector<16x128xf32>
    %c1_35 = arith.constant 1 : index
    %c0_36 = arith.constant 0 : index
    %31 = vector.load %arg8[%c1_35, %c0_36] : memref<18x128xf32, #tpu.memory_space<vmem>>, vector<16x128xf32>
    tpu.vector_store %arg8[%c1_35, %c0_36], %30 {strides = array<i32>} : memref<18x128xf32, #tpu.memory_space<vmem>>, vector<16x128xf32>,
    %c0_37 = arith.constant 0 : index
    %c0_38 = arith.constant 0 : index
    %32 = vector.load %arg8[%c0_37, %c0_38] : memref<18x128xf32, #tpu.memory_space<vmem>>, vector<16x128xf32>
    %c1_39 = arith.constant 1 : index
    %c0_40 = arith.constant 0 : index
    %c0_41 = arith.constant 0 : index
    %c0_42 = arith.constant 0 : index
    %33 = vector.load %arg3[%c1_39, %c0_40, %c0_41, %c0_42] : memref<4x3x128x128xf32, #tpu.memory_space<vmem>>, vector<1x1x128x128xf32>
    %34 = vector.shape_cast %33 : vector<1x1x128x128xf32> to vector<128x128xf32>
    %cst_43 = arith.constant dense<0.000000e+00> : vector<16x128xf32>
    %35 = tpu.matmul %32, %34, %cst_43 {dimension_numbers = #tpu.dot_dimension_numbers<[1], [0], [0], [1], [0, 0, 1, 1], [], []>} : vector<16x128xf32>, vector<128x128xf32>, vector<16x128xf32> -> vector<16x128xf32>
    %c1_44 = arith.constant 1 : index
    %c0_45 = arith.constant 0 : index
    %36 = vector.load %arg8[%c1_44, %c0_45] : memref<18x128xf32, #tpu.memory_space<vmem>>, vector<16x128xf32>
    %c1_46 = arith.constant 1 : index
    %c1_47 = arith.constant 1 : index
    %c0_48 = arith.constant 0 : index
    %c0_49 = arith.constant 0 : index
    %37 = vector.load %arg3[%c1_46, %c1_47, %c0_48, %c0_49] : memref<4x3x128x128xf32, #tpu.memory_space<vmem>>, vector<1x1x128x128xf32>
    %38 = vector.shape_cast %37 : vector<1x1x128x128xf32> to vector<128x128xf32>
    %cst_50 = arith.constant dense<0.000000e+00> : vector<16x128xf32>
    %39 = tpu.matmul %36, %38, %cst_50 {dimension_numbers = #tpu.dot_dimension_numbers<[1], [0], [0], [1], [0, 0, 1, 1], [], []>} : vector<16x128xf32>, vector<128x128xf32>, vector<16x128xf32> -> vector<16x128xf32>
    %40 = arith.addf %35, %39 : vector<16x128xf32>
    %c2_51 = arith.constant 2 : index
    %c0_52 = arith.constant 0 : index
    %41 = vector.load %arg8[%c2_51, %c0_52] : memref<18x128xf32, #tpu.memory_space<vmem>>, vector<16x128xf32>
    %c1_53 = arith.constant 1 : index
    %c2_54 = arith.constant 2 : index
    %c0_55 = arith.constant 0 : index
    %c0_56 = arith.constant 0 : index
    %42 = vector.load %arg3[%c1_53, %c2_54, %c0_55, %c0_56] : memref<4x3x128x128xf32, #tpu.memory_space<vmem>>, vector<1x1x128x128xf32>
    %43 = vector.shape_cast %42 : vector<1x1x128x128xf32> to vector<128x128xf32>
    %cst_57 = arith.constant dense<0.000000e+00> : vector<16x128xf32>
    %44 = tpu.matmul %41, %43, %cst_57 {dimension_numbers = #tpu.dot_dimension_numbers<[1], [0], [0], [1], [0, 0, 1, 1], [], []>} : vector<16x128xf32>, vector<128x128xf32>, vector<16x128xf32> -> vector<16x128xf32>
    %45 = arith.addf %40, %44 : vector<16x128xf32>
    %c1_58 = arith.constant 1 : index
    %c0_59 = arith.constant 0 : index
    %c0_60 = arith.constant 0 : index
    %46 = vector.load %arg4[%c1_58, %c0_59, %c0_60] : memref<4x1x128xf32, #tpu.memory_space<vmem>>, vector<1x1x128xf32>
    %47 = vector.shape_cast %46 : vector<1x1x128xf32> to vector<1x128xf32>
    %48 = vector.broadcast %47 : vector<1x128xf32> to vector<16x128xf32>
    %49 = arith.addf %45, %48 : vector<16x128xf32>
    %50 = arith.addf %49, %7 : vector<16x128xf32>
    %51 = arith.addf %5, %50 : vector<16x128xf32>
    %cst_61 = arith.constant 0.000000e+00 : f32
    %52 = vector.broadcast %cst_61 : f32 to vector<16x128xf32>
    %53 = arith.maximumf %51, %52 : vector<16x128xf32>
    %c1_62 = arith.constant 1 : index
    %c0_63 = arith.constant 0 : index
    %54 = vector.load %arg8[%c1_62, %c0_63] : memref<18x128xf32, #tpu.memory_space<vmem>>, vector<16x128xf32>
    tpu.vector_store %arg8[%c1_62, %c0_63], %53 {strides = array<i32>} : memref<18x128xf32, #tpu.memory_space<vmem>>, vector<16x128xf32>,
    %c0_64 = arith.constant 0 : index
    %c0_65 = arith.constant 0 : index
    %55 = vector.load %arg8[%c0_64, %c0_65] : memref<18x128xf32, #tpu.memory_space<vmem>>, vector<16x128xf32>
    %c2_66 = arith.constant 2 : index
    %c0_67 = arith.constant 0 : index
    %c0_68 = arith.constant 0 : index
    %c0_69 = arith.constant 0 : index
    %56 = vector.load %arg3[%c2_66, %c0_67, %c0_68, %c0_69] : memref<4x3x128x128xf32, #tpu.memory_space<vmem>>, vector<1x1x128x128xf32>
    %57 = vector.shape_cast %56 : vector<1x1x128x128xf32> to vector<128x128xf32>
    %cst_70 = arith.constant dense<0.000000e+00> : vector<16x128xf32>
    %58 = tpu.matmul %55, %57, %cst_70 {dimension_numbers = #tpu.dot_dimension_numbers<[1], [0], [0], [1], [0, 0, 1, 1], [], []>} : vector<16x128xf32>, vector<128x128xf32>, vector<16x128xf32> -> vector<16x128xf32>
    %c1_71 = arith.constant 1 : index
    %c0_72 = arith.constant 0 : index
    %59 = vector.load %arg8[%c1_71, %c0_72] : memref<18x128xf32, #tpu.memory_space<vmem>>, vector<16x128xf32>
    %c2_73 = arith.constant 2 : index
    %c1_74 = arith.constant 1 : index
    %c0_75 = arith.constant 0 : index
    %c0_76 = arith.constant 0 : index
    %60 = vector.load %arg3[%c2_73, %c1_74, %c0_75, %c0_76] : memref<4x3x128x128xf32, #tpu.memory_space<vmem>>, vector<1x1x128x128xf32>
    %61 = vector.shape_cast %60 : vector<1x1x128x128xf32> to vector<128x128xf32>
    %cst_77 = arith.constant dense<0.000000e+00> : vector<16x128xf32>
    %62 = tpu.matmul %59, %61, %cst_77 {dimension_numbers = #tpu.dot_dimension_numbers<[1], [0], [0], [1], [0, 0, 1, 1], [], []>} : vector<16x128xf32>, vector<128x128xf32>, vector<16x128xf32> -> vector<16x128xf32>
    %63 = arith.addf %58, %62 : vector<16x128xf32>
    %c2_78 = arith.constant 2 : index
    %c0_79 = arith.constant 0 : index
    %64 = vector.load %arg8[%c2_78, %c0_79] : memref<18x128xf32, #tpu.memory_space<vmem>>, vector<16x128xf32>
    %c2_80 = arith.constant 2 : index
    %c2_81 = arith.constant 2 : index
    %c0_82 = arith.constant 0 : index
    %c0_83 = arith.constant 0 : index
    %65 = vector.load %arg3[%c2_80, %c2_81, %c0_82, %c0_83] : memref<4x3x128x128xf32, #tpu.memory_space<vmem>>, vector<1x1x128x128xf32>
    %66 = vector.shape_cast %65 : vector<1x1x128x128xf32> to vector<128x128xf32>
    %cst_84 = arith.constant dense<0.000000e+00> : vector<16x128xf32>
    %67 = tpu.matmul %64, %66, %cst_84 {dimension_numbers = #tpu.dot_dimension_numbers<[1], [0], [0], [1], [0, 0, 1, 1], [], []>} : vector<16x128xf32>, vector<128x128xf32>, vector<16x128xf32> -> vector<16x128xf32>
    %68 = arith.addf %63, %67 : vector<16x128xf32>
    %c2_85 = arith.constant 2 : index
    %c0_86 = arith.constant 0 : index
    %c0_87 = arith.constant 0 : index
    %69 = vector.load %arg4[%c2_85, %c0_86, %c0_87] : memref<4x1x128xf32, #tpu.memory_space<vmem>>, vector<1x1x128xf32>
    %70 = vector.shape_cast %69 : vector<1x1x128xf32> to vector<1x128xf32>
    %71 = vector.broadcast %70 : vector<1x128xf32> to vector<16x128xf32>
    %72 = arith.addf %68, %71 : vector<16x128xf32>
    %cst_88 = arith.constant 0.000000e+00 : f32
    %73 = vector.broadcast %cst_88 : f32 to vector<16x128xf32>
    %74 = arith.maximumf %72, %73 : vector<16x128xf32>
    %c1_89 = arith.constant 1 : index
    %c0_90 = arith.constant 0 : index
    %75 = vector.load %arg8[%c1_89, %c0_90] : memref<18x128xf32, #tpu.memory_space<vmem>>, vector<16x128xf32>
    tpu.vector_store %arg8[%c1_89, %c0_90], %74 {strides = array<i32>} : memref<18x128xf32, #tpu.memory_space<vmem>>, vector<16x128xf32>,
    %c0_91 = arith.constant 0 : index
    %c0_92 = arith.constant 0 : index
    %76 = vector.load %arg8[%c0_91, %c0_92] : memref<18x128xf32, #tpu.memory_space<vmem>>, vector<16x128xf32>
    %c3 = arith.constant 3 : index
    %c0_93 = arith.constant 0 : index
    %c0_94 = arith.constant 0 : index
    %c0_95 = arith.constant 0 : index
    %77 = vector.load %arg3[%c3, %c0_93, %c0_94, %c0_95] : memref<4x3x128x128xf32, #tpu.memory_space<vmem>>, vector<1x1x128x128xf32>
    %78 = vector.shape_cast %77 : vector<1x1x128x128xf32> to vector<128x128xf32>
    %cst_96 = arith.constant dense<0.000000e+00> : vector<16x128xf32>
    %79 = tpu.matmul %76, %78, %cst_96 {dimension_numbers = #tpu.dot_dimension_numbers<[1], [0], [0], [1], [0, 0, 1, 1], [], []>} : vector<16x128xf32>, vector<128x128xf32>, vector<16x128xf32> -> vector<16x128xf32>
    %c1_97 = arith.constant 1 : index
    %c0_98 = arith.constant 0 : index
    %80 = vector.load %arg8[%c1_97, %c0_98] : memref<18x128xf32, #tpu.memory_space<vmem>>, vector<16x128xf32>
    %c3_99 = arith.constant 3 : index
    %c1_100 = arith.constant 1 : index
    %c0_101 = arith.constant 0 : index
    %c0_102 = arith.constant 0 : index
    %81 = vector.load %arg3[%c3_99, %c1_100, %c0_101, %c0_102] : memref<4x3x128x128xf32, #tpu.memory_space<vmem>>, vector<1x1x128x128xf32>
    %82 = vector.shape_cast %81 : vector<1x1x128x128xf32> to vector<128x128xf32>
    %cst_103 = arith.constant dense<0.000000e+00> : vector<16x128xf32>
    %83 = tpu.matmul %80, %82, %cst_103 {dimension_numbers = #tpu.dot_dimension_numbers<[1], [0], [0], [1], [0, 0, 1, 1], [], []>} : vector<16x128xf32>, vector<128x128xf32>, vector<16x128xf32> -> vector<16x128xf32>
    %84 = arith.addf %79, %83 : vector<16x128xf32>
    %c2_104 = arith.constant 2 : index
    %c0_105 = arith.constant 0 : index
    %85 = vector.load %arg8[%c2_104, %c0_105] : memref<18x128xf32, #tpu.memory_space<vmem>>, vector<16x128xf32>
    %c3_106 = arith.constant 3 : index
    %c2_107 = arith.constant 2 : index
    %c0_108 = arith.constant 0 : index
    %c0_109 = arith.constant 0 : index
    %86 = vector.load %arg3[%c3_106, %c2_107, %c0_108, %c0_109] : memref<4x3x128x128xf32, #tpu.memory_space<vmem>>, vector<1x1x128x128xf32>
    %87 = vector.shape_cast %86 : vector<1x1x128x128xf32> to vector<128x128xf32>
    %cst_110 = arith.constant dense<0.000000e+00> : vector<16x128xf32>
    %88 = tpu.matmul %85, %87, %cst_110 {dimension_numbers = #tpu.dot_dimension_numbers<[1], [0], [0], [1], [0, 0, 1, 1], [], []>} : vector<16x128xf32>, vector<128x128xf32>, vector<16x128xf32> -> vector<16x128xf32>
    %89 = arith.addf %84, %88 : vector<16x128xf32>
    %c3_111 = arith.constant 3 : index
    %c0_112 = arith.constant 0 : index
    %c0_113 = arith.constant 0 : index
    %90 = vector.load %arg4[%c3_111, %c0_112, %c0_113] : memref<4x1x128xf32, #tpu.memory_space<vmem>>, vector<1x1x128xf32>
    %91 = vector.shape_cast %90 : vector<1x1x128xf32> to vector<1x128xf32>
    %92 = vector.broadcast %91 : vector<1x128xf32> to vector<16x128xf32>
    %93 = arith.addf %89, %92 : vector<16x128xf32>
    %94 = arith.addf %93, %51 : vector<16x128xf32>
    %c0_114 = arith.constant 0 : index
    %c0_115 = arith.constant 0 : index
    %95 = vector.load %arg5[%c0_114, %c0_115] : memref<32x16xf32, #tpu.memory_space<vmem>>, vector<32x16xf32>
    %cst_116 = arith.constant dense<0.000000e+00> : vector<32x128xf32>
    %96 = tpu.matmul %95, %94, %cst_116 {dimension_numbers = #tpu.dot_dimension_numbers<[1], [0], [0], [1], [0, 0, 1, 1], [], []>} : vector<32x16xf32>, vector<16x128xf32>, vector<32x128xf32> -> vector<32x128xf32>
    %c0_117 = arith.constant 0 : index
    %c0_118 = arith.constant 0 : index
    %97 = vector.load %arg6[%c0_117, %c0_118] : memref<128x256xf32, #tpu.memory_space<vmem>>, vector<128x256xf32>
    %cst_119 = arith.constant dense<0.000000e+00> : vector<32x256xf32>
    %98 = tpu.matmul %96, %97, %cst_119 {dimension_numbers = #tpu.dot_dimension_numbers<[1], [0], [0], [1], [0, 0, 1, 1], [], []>} : vector<32x128xf32>, vector<128x256xf32>, vector<32x256xf32> -> vector<32x256xf32>
    %c0_120 = arith.constant 0 : index
    %c0_121 = arith.constant 0 : index
    %c0_122 = arith.constant 0 : index
    %99 = vector.load %arg7[%c0_120, %c0_121, %c0_122] : memref<1x32x256xf32, #tpu.memory_space<vmem>>, vector<1x32x256xf32>
    %100 = vector.shape_cast %99 : vector<1x32x256xf32> to vector<32x256xf32>
    %101 = vector.shape_cast %98 : vector<32x256xf32> to vector<1x32x256xf32>
    tpu.vector_store %arg7[%c0_120, %c0_121, %c0_122], %101 {strides = array<i32>} : memref<1x32x256xf32, #tpu.memory_space<vmem>>, vector<1x32x256xf32>,
    return
  }
  func.func @transform_0(%arg0: i32) -> (i32, i32, i32) {
    %c0_i32 = arith.constant 0 : i32
    %c0_i32_0 = arith.constant 0 : i32
    %c0_i32_1 = arith.constant 0 : i32
    return %arg0, %c0_i32, %c0_i32_0 : i32, i32, i32
  }
  func.func @transform_1(%arg0: i32) -> (i32, i32, i32) {
    %c0_i32 = arith.constant 0 : i32
    %c0_i32_0 = arith.constant 0 : i32
    %c0_i32_1 = arith.constant 0 : i32
    return %arg0, %c0_i32, %c0_i32_0 : i32, i32, i32
  }
  func.func @transform_2(%arg0: i32) -> (i32, i32, i32, i32) {
    %c0_i32 = arith.constant 0 : i32
    %c0_i32_0 = arith.constant 0 : i32
    %c0_i32_1 = arith.constant 0 : i32
    %c0_i32_2 = arith.constant 0 : i32
    %c0_i32_3 = arith.constant 0 : i32
    return %c0_i32, %c0_i32_0, %c0_i32_1, %c0_i32_2 : i32, i32, i32, i32
  }
  func.func @transform_3(%arg0: i32) -> (i32, i32, i32) {
    %c0_i32 = arith.constant 0 : i32
    %c0_i32_0 = arith.constant 0 : i32
    %c0_i32_1 = arith.constant 0 : i32
    %c0_i32_2 = arith.constant 0 : i32
    return %c0_i32, %c0_i32_0, %c0_i32_1 : i32, i32, i32
  }
  func.func @transform_4(%arg0: i32) -> (i32, i32) {
    %c0_i32 = arith.constant 0 : i32
    %c0_i32_0 = arith.constant 0 : i32
    %c0_i32_1 = arith.constant 0 : i32
    return %c0_i32, %c0_i32_0 : i32, i32
  }
  func.func @transform_5(%arg0: i32) -> (i32, i32) {
    %c0_i32 = arith.constant 0 : i32
    %c0_i32_0 = arith.constant 0 : i32
    %c0_i32_1 = arith.constant 0 : i32
    return %c0_i32, %c0_i32_0 : i32, i32
  }
  func.func @transform_6(%arg0: i32) -> (i32, i32, i32) {
    %c0_i32 = arith.constant 0 : i32
    %c0_i32_0 = arith.constant 0 : i32
    %c0_i32_1 = arith.constant 0 : i32
    return %arg0, %c0_i32, %c0_i32_0 : i32, i32, i32
  }
}

</mosaic_0001>

<llo_original>
// kernel: tpu_custom_call.1
$region0: #{tpu_custom_call.1}
  #allocation0 [shape = 'u32[]', space=smem, size = 0x4, offset = 0x4, fixed_abs, tag = 'smem constant byte address 0x4 - core index']
  #allocation1 [shape = 'u32[144,128]{1,0:T(1,128)}', space=vmem, size = 0x12000, scoped, tag = 'internal scratch']
  #allocation2 [shape = 'f32[18,128]{1,0:T(8,128)}', space=vmem, size = 0x3000, scoped, tag = 'scratch operand']
  %s0 = inlined_call_operand.vmem [shape: f32[2,16,128], index: 0, kind: input, shape index: {}]
  %s1 = inlined_call_operand.hbm [shape: f32[2,16,128], index: 1, kind: input, shape index: {}]
  %s2 = inlined_call_operand.hbm [shape: f32[4,3,128,128], index: 2, kind: input, shape index: {}]
  %s3 = inlined_call_operand.vmem [shape: f32[4,1,128], index: 3, kind: input, shape index: {}]
  %s4 = inlined_call_operand.vmem [shape: f32[32,16], index: 4, kind: input, shape index: {}]
  %s5 = inlined_call_operand.hbm [shape: f32[128,256], index: 5, kind: input, shape index: {}]
  %s6 = inlined_call_operand.hbm [shape: f32[2,32,256], index: 6, kind: output, shape index: {}]
  %s7 = sld [smem:[#allocation0]]
  $region69: #{tpu_custom_call.1} parent=0
    _
  %s9 = ssub.s32 1, %s7
  %s10 = scalar_select 0, %s9, %s7
  $region1: #{tpu_custom_call.1} parent=0
    #allocation3 [shape = 'u8[16384]{0}', space=vmem, size = 0x4000, scoped, tag = 'input window, operand 1']
    #allocation4 [shape = 's32[2]{0}', space=sflag, size = 0x8, scoped, tag = 'scoped memory for tpu_custom_call.1']
    #allocation5 [shape = 's32[2]{0}', space=sflag, size = 0x8, scoped, tag = 'scoped memory for tpu_custom_call.1']
    #allocation6 [shape = 'u8[786432]{0}', space=vmem, size = 0xc0000, scoped, tag = 'input window, operand 2, single buffered']
    #allocation7 [shape = 's32[1]{0}', space=sflag, size = 0x4, scoped, tag = 'scoped memory for tpu_custom_call.1']
    #allocation8 [shape = 'u8[131072]{0}', space=vmem, size = 0x20000, scoped, tag = 'input window, operand 5, single buffered']
    #allocation9 [shape = 'u8[65536]{0}', space=vmem, size = 0x10000, scoped, tag = 'output window, operand 0']
    %11 = vsyncpa [#allocation4], 0
    %s12 = scalar_lea.sflag [#allocation4], 1
    %13 = vsyncpa %s12, 0
    %14 = vsyncpa [#allocation7], 0
    %15 = vsyncpa [#allocation5], 0
    %s16 = scalar_lea.sflag [#allocation5], 1
    %17 = vsyncpa %s16, 0
    loop: start=0, step=1, limit=4
    $region2: #{tpu_custom_call.1} parent=1 // loop_pre_header
      _
    $region3: #{tpu_custom_call.1} parent=1 // loop_header
      %s19 = sphi 0, %s23
      %p20 = scmp.ge.s32.totalorder %s19, 4
      %s29 = sphi 0, %s31
      %s32 = sphi 0, %s29
      %s33 = sphi 0, %s32
      %s49 = sphi 0, %s33
      %s55 = sphi 0, %s57
      %s58 = sphi 0, %s55
      %s59 = sphi 0, %s58
      %s75 = sphi 0, %s59
      %s79 = sphi 0, %s79
      %s81 = sphi 0, %s79
      %s82 = sphi 0, %s81
      %s96 = sphi 0, %s82
      %s100 = sphi 0, %s100
      %s102 = sphi 0, %s100
      %s103 = sphi 0, %s102
      %s117 = sphi 0, %s103
      %s121 = sphi 0, %s121
      %s123 = sphi 0, %s121
      %s124 = sphi 0, %s123
      %s138 = sphi 0, %s124
      %s142 = sphi 0, %s142
      %s144 = sphi 0, %s142
      %s145 = sphi 0, %s144
      %s159 = sphi 0, %s145
      %s165 = sphi 0, %s167
      %s168 = sphi 0, %s165
      %s169 = sphi 0, %s168
      %s185 = sphi 0, %s169
    $region4: #{tpu_custom_call.1} parent=1 // loop_header_branch
      %22 = sbr.rel (%p20) target = $region8
    $region5: #{tpu_custom_call.1} parent=1 // loop_body
      %s24 = ssub.s32 %s19, 1
      %s25 = ssub.s32 %s19, 2
      %s26 = sadd.s32 %s19, 1
      %s27 = ssub.s32 %s19, %s26
      %p28 = scmp.eq.s32.totalorder %s27, 0
      %s30 = sadd.s32 %s29, 1
      %s31 = scalar_select %p28, %s29, %s30
      %p34 = pneg %p28
      %p35 = scmp.eq.s32.totalorder %s19, 1
      %p36 = por %p34, %p35
      %p37 = scmp.ne.s32.totalorder %s29, %s32
      %p38 = scmp.eq.s32.totalorder %s19, 0
      %p39 = por %p37, %p38
      %p40 = scmp.ne.s32.totalorder %s29, %s32
      %p41 = scmp.eq.s32.totalorder %s24, 1
      %p42 = por %p40, %p41
      %p43 = scmp.ne.s32.totalorder %s32, %s33
      %p44 = scmp.eq.s32.totalorder %s24, 0
      %p45 = por %p43, %p44
      %p46 = scmp.ne.s32.totalorder %s32, %s33
      %p47 = scmp.eq.s32.totalorder %s25, 1
      %p48 = por %p46, %p47
      %p50 = scmp.ne.s32.totalorder %s33, %s49
      %p51 = scmp.eq.s32.totalorder %s25, 0
      %p52 = por %p50, %p51
      %s53 = ssub.s32 %s19, %s26
      %p54 = scmp.eq.s32.totalorder %s53, 0
      %s56 = sadd.s32 %s55, 1
      %s57 = scalar_select %p54, %s55, %s56
      %p60 = pneg %p54
      %p61 = scmp.eq.s32.totalorder %s19, 1
      %p62 = por %p60, %p61
      %p63 = scmp.ne.s32.totalorder %s55, %s58
      %p64 = scmp.eq.s32.totalorder %s19, 0
      %p65 = por %p63, %p64
      %p66 = scmp.ne.s32.totalorder %s55, %s58
      %p67 = scmp.eq.s32.totalorder %s24, 1
      %p68 = por %p66, %p67
      %p69 = scmp.ne.s32.totalorder %s58, %s59
      %p70 = scmp.eq.s32.totalorder %s24, 0
      %p71 = por %p69, %p70
      %p72 = scmp.ne.s32.totalorder %s58, %s59
      %p73 = scmp.eq.s32.totalorder %s25, 1
      %p74 = por %p72, %p73
      %p76 = scmp.ne.s32.totalorder %s59, %s75
      %p77 = scmp.eq.s32.totalorder %s25, 0
      %p78 = por %p76, %p77
      %s80 = sadd.s32 %s79, 1
      %p83 = scmp.eq.s32.totalorder %s19, 1
      %p84 = scmp.ne.s32.totalorder %s79, %s81
      %p85 = scmp.eq.s32.totalorder %s19, 0
      %p86 = por %p84, %p85
      %p87 = scmp.ne.s32.totalorder %s79, %s81
      %p88 = scmp.eq.s32.totalorder %s24, 1
      %p89 = por %p87, %p88
      %p90 = scmp.ne.s32.totalorder %s81, %s82
      %p91 = scmp.eq.s32.totalorder %s24, 0
      %p92 = por %p90, %p91
      %p93 = scmp.ne.s32.totalorder %s81, %s82
      %p94 = scmp.eq.s32.totalorder %s25, 1
      %p95 = por %p93, %p94
      %p97 = scmp.ne.s32.totalorder %s82, %s96
      %p98 = scmp.eq.s32.totalorder %s25, 0
      %p99 = por %p97, %p98
      %s101 = sadd.s32 %s100, 1
      %p104 = scmp.eq.s32.totalorder %s19, 1
      %p105 = scmp.ne.s32.totalorder %s100, %s102
      %p106 = scmp.eq.s32.totalorder %s19, 0
      %p107 = por %p105, %p106
      %p108 = scmp.ne.s32.totalorder %s100, %s102
      %p109 = scmp.eq.s32.totalorder %s24, 1
      %p110 = por %p108, %p109
      %p111 = scmp.ne.s32.totalorder %s102, %s103
      %p112 = scmp.eq.s32.totalorder %s24, 0
      %p113 = por %p111, %p112
      %p114 = scmp.ne.s32.totalorder %s102, %s103
      %p115 = scmp.eq.s32.totalorder %s25, 1
      %p116 = por %p114, %p115
      %p118 = scmp.ne.s32.totalorder %s103, %s117
      %p119 = scmp.eq.s32.totalorder %s25, 0
      %p120 = por %p118, %p119
      %s122 = sadd.s32 %s121, 1
      %p125 = scmp.eq.s32.totalorder %s19, 1
      %p126 = scmp.ne.s32.totalorder %s121, %s123
      %p127 = scmp.eq.s32.totalorder %s19, 0
      %p128 = por %p126, %p127
      %p129 = scmp.ne.s32.totalorder %s121, %s123
      %p130 = scmp.eq.s32.totalorder %s24, 1
      %p131 = por %p129, %p130
      %p132 = scmp.ne.s32.totalorder %s123, %s124
      %p133 = scmp.eq.s32.totalorder %s24, 0
      %p134 = por %p132, %p133
      %p135 = scmp.ne.s32.totalorder %s123, %s124
      %p136 = scmp.eq.s32.totalorder %s25, 1
      %p137 = por %p135, %p136
      %p139 = scmp.ne.s32.totalorder %s124, %s138
      %p140 = scmp.eq.s32.totalorder %s25, 0
      %p141 = por %p139, %p140
      %s143 = sadd.s32 %s142, 1
      %p146 = scmp.eq.s32.totalorder %s19, 1
      %p147 = scmp.ne.s32.totalorder %s142, %s144
      %p148 = scmp.eq.s32.totalorder %s19, 0
      %p149 = por %p147, %p148
      %p150 = scmp.ne.s32.totalorder %s142, %s144
      %p151 = scmp.eq.s32.totalorder %s24, 1
      %p152 = por %p150, %p151
      %p153 = scmp.ne.s32.totalorder %s144, %s145
      %p154 = scmp.eq.s32.totalorder %s24, 0
      %p155 = por %p153, %p154
      %p156 = scmp.ne.s32.totalorder %s144, %s145
      %p157 = scmp.eq.s32.totalorder %s25, 1
      %p158 = por %p156, %p157
      %p160 = scmp.ne.s32.totalorder %s145, %s159
      %p161 = scmp.eq.s32.totalorder %s25, 0
      %p162 = por %p160, %p161
      %s163 = ssub.s32 %s19, %s26
      %p164 = scmp.eq.s32.totalorder %s163, 0
      %s166 = sadd.s32 %s165, 1
      %s167 = scalar_select %p164, %s165, %s166
      %p170 = pneg %p164
      %p171 = scmp.eq.s32.totalorder %s19, 1
      %p172 = por %p170, %p171
      %p173 = scmp.ne.s32.totalorder %s165, %s168
      %p174 = scmp.eq.s32.totalorder %s19, 0
      %p175 = por %p173, %p174
      %p176 = scmp.ne.s32.totalorder %s165, %s168
      %p177 = scmp.eq.s32.totalorder %s24, 1
      %p178 = por %p176, %p177
      %p179 = scmp.ne.s32.totalorder %s168, %s169
      %p180 = scmp.eq.s32.totalorder %s24, 0
      %p181 = por %p179, %p180
      %p182 = scmp.ne.s32.totalorder %s168, %s169
      %p183 = scmp.eq.s32.totalorder %s25, 1
      %p184 = por %p182, %p183
      %p186 = scmp.ne.s32.totalorder %s169, %s185
      %p187 = scmp.eq.s32.totalorder %s25, 0
      %p188 = por %p186, %p187
      %p189 = scmp.le.s32.totalorder 1, %s19
      %p190 = scmp.lt.s32.totalorder %s19, 3
      %p191 = pnand %p189, %p190
      %p192 = pneg %p191
      // Predicated region
      $region9: #{tpu_custom_call.1} parent=5 // pred_check
        _
      $region10: #{tpu_custom_call.1} parent=5 // pred_check_branch
        %194 = sbr.rel (%p191) target = $region12
      $region11: #{tpu_custom_call.1} parent=5 // pred_region
        %s195 = ssub.s32 %s19, 1
        // Predicated region
        $region13: #{tpu_custom_call.1} parent=11 // pred_check
          %p196 = pneg %p92
        $region14: #{tpu_custom_call.1} parent=11 // pred_check_branch
          %198 = sbr.rel (%p196) target = $region16
        $region15: #{tpu_custom_call.1} parent=11 // pred_region
          %s200 = ssub.s32 24576, 24576
          %201 = vsyncadd [#allocation7], %s200
          %s202 = sshll.u32 [#allocation6], 4
          %s203 = int_to_ptr.vmem [resolvable:$true] %s202
          %208 = dma.hbm_to_vmem [thread:$0]  %s2, 24576, %s203, [#allocation7], 128, 128, 8
        $region16: #{tpu_custom_call.1} parent=11 // pred_fallthru
          _
        // Predicated region
        $region17: #{tpu_custom_call.1} parent=11 // pred_check
          %p209 = pneg %p113
        $region18: #{tpu_custom_call.1} parent=11 // pred_check_branch
          %211 = sbr.rel (%p209) target = $region20
        $region19: #{tpu_custom_call.1} parent=11 // pred_region
          _
        $region20: #{tpu_custom_call.1} parent=11 // pred_fallthru
          _
        // Predicated region
        $region21: #{tpu_custom_call.1} parent=11 // pred_check
          %p212 = pneg %p134
        $region22: #{tpu_custom_call.1} parent=11 // pred_check_branch
          %214 = sbr.rel (%p212) target = $region24
        $region23: #{tpu_custom_call.1} parent=11 // pred_region
          _
        $region24: #{tpu_custom_call.1} parent=11 // pred_fallthru
          _
        // Predicated region
        $region25: #{tpu_custom_call.1} parent=11 // pred_check
          %p215 = pneg %p155
        $region26: #{tpu_custom_call.1} parent=11 // pred_check_branch
          %217 = sbr.rel (%p215) target = $region28
        $region27: #{tpu_custom_call.1} parent=11 // pred_region
          %s219 = ssub.s32 4096, 4096
          %220 = vsyncadd [#allocation7], %s219
          %s221 = sshll.u32 [#allocation8], 4
          %s222 = int_to_ptr.vmem [resolvable:$true] %s221
          %227 = dma.hbm_to_vmem [thread:$0]  %s5, 4096, %s222, [#allocation7], 256, 256, 16
        $region28: #{tpu_custom_call.1} parent=11 // pred_fallthru
          _
      $region12: #{tpu_custom_call.1} parent=5 // pred_fallthru
        _
      %p228 = scmp.lt.s32.totalorder %s19, 2
      // Predicated region
      $region29: #{tpu_custom_call.1} parent=5 // pred_check
        %p229 = pneg %p228
      $region30: #{tpu_custom_call.1} parent=5 // pred_check_branch
        %231 = sbr.rel (%p229) target = $region32
      $region31: #{tpu_custom_call.1} parent=5 // pred_region
        // Predicated region
        $region33: #{tpu_custom_call.1} parent=31 // pred_check
          %p232 = pneg %p39
        $region34: #{tpu_custom_call.1} parent=31 // pred_check_branch
          %234 = sbr.rel (%p232) target = $region36
        $region35: #{tpu_custom_call.1} parent=31 // pred_region
          %p235 = scmp.lt.s32.totalorder %s19, 1
          %s236 = scalar_select %p235, %s19, 1
          %s237 = smul.addr %s236, 2
          %s238 = smul.addr %s237, 8
          %s239 = scalar_lea.vmem %s0, %s238
        $region36: #{tpu_custom_call.1} parent=31 // pred_fallthru
          _
        // Predicated region
        $region37: #{tpu_custom_call.1} parent=31 // pred_check
          %p240 = pneg %p65
        $region38: #{tpu_custom_call.1} parent=31 // pred_check_branch
          %242 = sbr.rel (%p240) target = $region40
        $region39: #{tpu_custom_call.1} parent=31 // pred_region
          %s243 = sand.u32 %s55, 1
          %s244 = scalar_lea.sflag [#allocation4], %s243
          %s245 = sand.u32 %s55, 1
          %s246 = smul.addr %s245, 16
          %s247 = scalar_lea.vmem [#allocation3], %s246
          %s249 = ssub.s32 256, 256
          %250 = vsyncadd %s244, %s249
          %s251 = smul.addr %s19, 2
          %s252 = smul.addr %s251, 128
          %s253 = scalar_lea.hbm %s1, %s252
          %s254 = sshll.u32 %s247, 4
          %s255 = int_to_ptr.vmem [resolvable:$true] %s254
          %260 = dma.hbm_to_vmem [thread:$0]  %s253, 256, %s255, %s244, 128, 128, 8
        $region40: #{tpu_custom_call.1} parent=31 // pred_fallthru
          _
      $region32: #{tpu_custom_call.1} parent=5 // pred_fallthru
        _
      %p261 = scmp.le.s32.totalorder 1, %s19
      %p262 = scmp.lt.s32.totalorder %s19, 3
      %p263 = pnand %p261, %p262
      %p264 = pneg %p263
      // Predicated region
      $region41: #{tpu_custom_call.1} parent=5 // pred_check
        _
      $region42: #{tpu_custom_call.1} parent=5 // pred_check_branch
        %266 = sbr.rel (%p263) target = $region44
      $region43: #{tpu_custom_call.1} parent=5 // pred_region
        %s267 = ssub.s32 %s19, 1
        %s268 = sand.u32 %s58, 1
        %s269 = scalar_lea.sflag [#allocation4], %s268
        %s270 = sand.u32 %s58, 1
        %s271 = smul.addr %s270, 16
        %s272 = scalar_lea.vmem [#allocation3], %s271
        // Predicated region
        $region45: #{tpu_custom_call.1} parent=43 // pred_check
          %p273 = pneg %p71
        $region46: #{tpu_custom_call.1} parent=43 // pred_check_branch
          %275 = sbr.rel (%p273) target = $region48
        $region47: #{tpu_custom_call.1} parent=43 // pred_region
          %276 = dma.done %s269, 256
        $region48: #{tpu_custom_call.1} parent=43 // pred_fallthru
          _
        // Predicated region
        $region49: #{tpu_custom_call.1} parent=43 // pred_check
          %p277 = pneg %p92
        $region50: #{tpu_custom_call.1} parent=43 // pred_check_branch
          %279 = sbr.rel (%p277) target = $region52
        $region51: #{tpu_custom_call.1} parent=43 // pred_region
          %280 = dma.done [#allocation7], 24576
        $region52: #{tpu_custom_call.1} parent=43 // pred_fallthru
          _
        // Predicated region
        $region53: #{tpu_custom_call.1} parent=43 // pred_check
          %p281 = pneg %p155
        $region54: #{tpu_custom_call.1} parent=43 // pred_check_branch
          %283 = sbr.rel (%p281) target = $region56
        $region55: #{tpu_custom_call.1} parent=43 // pred_region
          %284 = dma.done [#allocation7], 4096
        $region56: #{tpu_custom_call.1} parent=43 // pred_fallthru
          _
        %p285 = scmp.lt.s32.totalorder %s24, 1
        %s286 = scalar_select %p285, %s24, 1
        %s287 = smul.addr %s286, 2
        %s288 = smul.addr %s287, 8
        %s289 = scalar_lea.vmem %s0, %s288
        %p290 = pneg %p45
        %p291 = pneg %p42
        %s292 = sand.u32 %s58, 1
        %s293 = scalar_lea.sflag [#allocation4], %s292
        %s294 = sand.u32 %s58, 1
        %s295 = smul.addr %s294, 16
        %s296 = scalar_lea.vmem [#allocation3], %s295
        %p297 = pneg %p71
        %p298 = pneg %p68
        %p299 = pneg %p92
        %p300 = pneg %p89
        %p301 = pneg %p113
        %p302 = pneg %p110
        %p303 = pneg %p134
        %p304 = pneg %p131
        %p305 = pneg %p155
        %p306 = pneg %p152
        %p307 = pneg %p181
        %p308 = pneg %p178
        %s309 = sand.u32 %s168, 1
        %s310 = scalar_lea.sflag [#allocation5], %s309
        %s311 = sand.u32 %s168, 1
        %s312 = smul.addr %s311, 64
        %s313 = scalar_lea.vmem [#allocation9], %s312
        %p314 = scmp.lt.s32.totalorder %s24, 1
        %s315 = scalar_select %p314, %s24, 1
        %s316 = smul.addr %s315, 2
        %s317 = smul.addr %s316, 8
        %s318 = scalar_lea.vmem %s0, %s317
        %319 = vst [vmem:[#allocation2] sm:$0x1] 0.0
        %320 = vst [vmem:[#allocation2 + $0x11] sm:$0x1] 0.0
        %v321 = vld [vmem:[%s318] sm:$0xff]
        %v322 = vld [vmem:[%s318 + $0x8] sm:$0xff]
        %v323 = vld [vmem:[%s272] sm:$0xff]
        %v324 = vld [vmem:[%s272 + $0x8] sm:$0xff]
        %v325 = vmax.f32 %v323, 0.0
        %v326 = vmax.f32 %v324, 0.0
        %327 = vst [vmem:[#allocation2 + $0x1] sm:$0xff] %v325
        %328 = vst [vmem:[#allocation2 + $0x9] sm:$0xff] %v326
        %v329 = vld [vmem:[#allocation2] sm:$0xff]
        %v330 = vld [vmem:[#allocation2 + $0x8] sm:$0xff]
        %v331 = vld [vmem:[#allocation6] sm:$0xff]
        %v332 = vld [vmem:[#allocation6 + $0x8] sm:$0xff]
        %v333 = vld [vmem:[#allocation6 + $0x10] sm:$0xff]
        %v334 = vld [vmem:[#allocation6 + $0x18] sm:$0xff]
        %v335 = vld [vmem:[#allocation6 + $0x20] sm:$0xff]
        %v336 = vld [vmem:[#allocation6 + $0x28] sm:$0xff]
        %v337 = vld [vmem:[#allocation6 + $0x30] sm:$0xff]
        %v338 = vld [vmem:[#allocation6 + $0x38] sm:$0xff]
        %v339 = vld [vmem:[#allocation6 + $0x40] sm:$0xff]
        %v340 = vld [vmem:[#allocation6 + $0x48] sm:$0xff]
        %v341 = vld [vmem:[#allocation6 + $0x50] sm:$0xff]
        %v342 = vld [vmem:[#allocation6 + $0x58] sm:$0xff]
        %v343 = vld [vmem:[#allocation6 + $0x60] sm:$0xff]
        %v344 = vld [vmem:[#allocation6 + $0x68] sm:$0xff]
        %v345 = vld [vmem:[#allocation6 + $0x70] sm:$0xff]
        %v346 = vld [vmem:[#allocation6 + $0x78] sm:$0xff]
        %v347 = vld [vmem:[#allocation2 + $0x1] sm:$0xff]
        %v348 = vld [vmem:[#allocation2 + $0x9] sm:$0xff]
        %s349 = scalar_lea.vmem [#allocation6], 128
        %v350 = vld [vmem:[%s349] sm:$0xff]
        %v351 = vld [vmem:[%s349 + $0x8] sm:$0xff]
        %v352 = vld [vmem:[%s349 + $0x10] sm:$0xff]
        %v353 = vld [vmem:[%s349 + $0x18] sm:$0xff]
        %v354 = vld [vmem:[%s349 + $0x20] sm:$0xff]
        %v355 = vld [vmem:[%s349 + $0x28] sm:$0xff]
        %v356 = vld [vmem:[%s349 + $0x30] sm:$0xff]
        %v357 = vld [vmem:[%s349 + $0x38] sm:$0xff]
        %v358 = vld [vmem:[%s349 + $0x40] sm:$0xff]
        %v359 = vld [vmem:[%s349 + $0x48] sm:$0xff]
        %v360 = vld [vmem:[%s349 + $0x50] sm:$0xff]
        %v361 = vld [vmem:[%s349 + $0x58] sm:$0xff]
        %v362 = vld [vmem:[%s349 + $0x60] sm:$0xff]
        %v363 = vld [vmem:[%s349 + $0x68] sm:$0xff]
        %v364 = vld [vmem:[%s349 + $0x70] sm:$0xff]
        %v365 = vld [vmem:[%s349 + $0x78] sm:$0xff]
        %366 = vmatprep.subr.mxu0 0.0
        %367 = vmatpush1.msra.mxu0 %v350
        %368 = vmatprep.subr.mxu0 0.0
        %369 = vmatpush1.msra.mxu0 %v351
        %370 = vmatprep.subr.mxu0 0.0
        %371 = vmatpush1.msra.mxu0 %v352
        %372 = vmatprep.subr.mxu0 0.0
        %373 = vmatpush1.msra.mxu0 %v353
        %374 = vmatprep.subr.mxu0 0.0
        %375 = vmatpush1.msra.mxu0 %v354
        %376 = vmatprep.subr.mxu0 0.0
        %377 = vmatpush1.msra.mxu0 %v355
        %378 = vmatprep.subr.mxu0 0.0
        %379 = vmatpush1.msra.mxu0 %v356
        %380 = vmatprep.subr.mxu0 0.0
        %381 = vmatpush1.msra.mxu0 %v357
        %382 = vmatprep.subr.mxu0 0.0
        %383 = vmatpush1.msra.mxu0 %v358
        %384 = vmatprep.subr.mxu0 0.0
        %385 = vmatpush1.msra.mxu0 %v359
        %386 = vmatprep.subr.mxu0 0.0
        %387 = vmatpush1.msra.mxu0 %v360
        %388 = vmatprep.subr.mxu0 0.0
        %389 = vmatpush1.msra.mxu0 %v361
        %390 = vmatprep.subr.mxu0 0.0
        %391 = vmatpush1.msra.mxu0 %v362
        %392 = vmatprep.subr.mxu0 0.0
        %393 = vmatpush1.msra.mxu0 %v363
        %394 = vmatprep.subr.mxu0 0.0
        %395 = vmatpush1.msra.mxu0 %v364
        %396 = vmatprep.subr.mxu0 0.0
        %397 = vmatpush1.msra.mxu0 %v365
        %398 = vmatprep.subr.mxu0 0.0
        %399 = vmatpush1.msra.mxu0 0.0
        %400 = vmatprep.subr.mxu0 0.0
        %401 = vmatpush1.msra.mxu0 0.0
        %402 = vmatprep.subr.mxu0 0.0
        %403 = vmatpush1.msra.mxu0 0.0
        %404 = vmatprep.subr.mxu0 0.0
        %405 = vmatpush1.msra.mxu0 0.0
        %406 = vmatprep.subr.mxu0 0.0
        %407 = vmatpush1.msra.mxu0 0.0
        %408 = vmatprep.subr.mxu0 0.0
        %409 = vmatpush1.msra.mxu0 0.0
        %410 = vmatprep.subr.mxu0 0.0
        %411 = vmatpush1.msra.mxu0 0.0
        %412 = vmatprep.subr.mxu0 0.0
        %413 = vmatpush1.msra.mxu0 0.0
        %414 = vmatprep.subr.mxu0 0.0
        %415 = vmatpush1.msra.mxu0 0.0
        %416 = vmatprep.subr.mxu0 0.0
        %417 = vmatpush1.msra.mxu0 0.0
        %418 = vmatprep.subr.mxu0 0.0
        %419 = vmatpush1.msra.mxu0 0.0
        %420 = vmatprep.subr.mxu0 0.0
        %421 = vmatpush1.msra.mxu0 0.0
        %422 = vmatprep.subr.mxu0 0.0
        %423 = vmatpush1.msra.mxu0 0.0
        %424 = vmatprep.subr.mxu0 0.0
        %425 = vmatpush1.msra.mxu0 0.0
        %426 = vmatprep.subr.mxu0 0.0
        %427 = vmatpush1.msra.mxu0 0.0
        %428 = vmatprep.subr.mxu0 0.0
        %429 = vmatpush1.msra.mxu0 0.0
        %430 = vmatprep.mubr.f32.mxu0 0.0
        %431 = vmatmul.mubr.f32.gmra.mrb[0].mxu0 %v347
        %v432 = vpop.f32.mrb[0].mxu0
        %v433 = vadd.f32 0.0, %v432
        %v434 = vpop.f32.mrb[0].mxu0
        %435 = vmatprep.mubr.f32.mxu0 0.0
        %436 = vmatmul.mubr.f32.gmra.mrb[0].mxu0 %v348
        %v437 = vpop.f32.mrb[0].mxu0
        %v438 = vadd.f32 0.0, %v437
        %v439 = vpop.f32.mrb[0].mxu0
        %440 = vdwg.mxu0
        %441 = vmatprep.subr.mxu0 0.0
        %442 = vmatpush1.msra.mxu0 %v331
        %443 = vmatprep.subr.mxu0 0.0
        %444 = vmatpush1.msra.mxu0 %v332
        %445 = vmatprep.subr.mxu0 0.0
        %446 = vmatpush1.msra.mxu0 %v333
        %447 = vmatprep.subr.mxu0 0.0
        %448 = vmatpush1.msra.mxu0 %v334
        %449 = vmatprep.subr.mxu0 0.0
        %450 = vmatpush1.msra.mxu0 %v335
        %451 = vmatprep.subr.mxu0 0.0
        %452 = vmatpush1.msra.mxu0 %v336
        %453 = vmatprep.subr.mxu0 0.0
        %454 = vmatpush1.msra.mxu0 %v337
        %455 = vmatprep.subr.mxu0 0.0
        %456 = vmatpush1.msra.mxu0 %v338
        %457 = vmatprep.subr.mxu0 0.0
        %458 = vmatpush1.msra.mxu0 %v339
        %459 = vmatprep.subr.mxu0 0.0
        %460 = vmatpush1.msra.mxu0 %v340
        %461 = vmatprep.subr.mxu0 0.0
        %462 = vmatpush1.msra.mxu0 %v341
        %463 = vmatprep.subr.mxu0 0.0
        %464 = vmatpush1.msra.mxu0 %v342
        %465 = vmatprep.subr.mxu0 0.0
        %466 = vmatpush1.msra.mxu0 %v343
        %467 = vmatprep.subr.mxu0 0.0
        %468 = vmatpush1.msra.mxu0 %v344
        %469 = vmatprep.subr.mxu0 0.0
        %470 = vmatpush1.msra.mxu0 %v345
        %471 = vmatprep.subr.mxu0 0.0
        %472 = vmatpush1.msra.mxu0 %v346
        %473 = vmatprep.subr.mxu0 0.0
        %474 = vmatpush1.msra.mxu0 0.0
        %475 = vmatprep.subr.mxu0 0.0
        %476 = vmatpush1.msra.mxu0 0.0
        %477 = vmatprep.subr.mxu0 0.0
        %478 = vmatpush1.msra.mxu0 0.0
        %479 = vmatprep.subr.mxu0 0.0
        %480 = vmatpush1.msra.mxu0 0.0
        %481 = vmatprep.subr.mxu0 0.0
        %482 = vmatpush1.msra.mxu0 0.0
        %483 = vmatprep.subr.mxu0 0.0
        %484 = vmatpush1.msra.mxu0 0.0
        %485 = vmatprep.subr.mxu0 0.0
        %486 = vmatpush1.msra.mxu0 0.0
        %487 = vmatprep.subr.mxu0 0.0
        %488 = vmatpush1.msra.mxu0 0.0
        %489 = vmatprep.subr.mxu0 0.0
        %490 = vmatpush1.msra.mxu0 0.0
        %491 = vmatprep.subr.mxu0 0.0
        %492 = vmatpush1.msra.mxu0 0.0
        %493 = vmatprep.subr.mxu0 0.0
        %494 = vmatpush1.msra.mxu0 0.0
        %495 = vmatprep.subr.mxu0 0.0
        %496 = vmatpush1.msra.mxu0 0.0
        %497 = vmatprep.subr.mxu0 0.0
        %498 = vmatpush1.msra.mxu0 0.0
        %499 = vmatprep.subr.mxu0 0.0
        %500 = vmatpush1.msra.mxu0 0.0
        %501 = vmatprep.subr.mxu0 0.0
        %502 = vmatpush1.msra.mxu0 0.0
        %503 = vmatprep.subr.mxu0 0.0
        %504 = vmatpush1.msra.mxu0 0.0
        %505 = vmatprep.mubr.f32.mxu0 0.0
        %506 = vmatmul.mubr.f32.gmra.mrb[0].mxu0 %v329
        %v507 = vpop.f32.mrb[0].mxu0
        %v508 = vadd.f32 %v433, %v507
        %v509 = vpop.f32.mrb[0].mxu0
        %510 = vmatprep.mubr.f32.mxu0 0.0
        %511 = vmatmul.mubr.f32.gmra.mrb[0].mxu0 %v330
        %v512 = vpop.f32.mrb[0].mxu0
        %v513 = vadd.f32 %v438, %v512
        %v514 = vpop.f32.mrb[0].mxu0
        %515 = vdwg.mxu0
        %v516 = vld [vmem:[#allocation2 + $0x2] sm:$0xff]
        %v517 = vld [vmem:[#allocation2 + $0xa] sm:$0xff]
        %s518 = scalar_lea.vmem [#allocation6], 256
        %v519 = vld [vmem:[%s518] sm:$0xff]
        %v520 = vld [vmem:[%s518 + $0x8] sm:$0xff]
        %v521 = vld [vmem:[%s518 + $0x10] sm:$0xff]
        %v522 = vld [vmem:[%s518 + $0x18] sm:$0xff]
        %v523 = vld [vmem:[%s518 + $0x20] sm:$0xff]
        %v524 = vld [vmem:[%s518 + $0x28] sm:$0xff]
        %v525 = vld [vmem:[%s518 + $0x30] sm:$0xff]
        %v526 = vld [vmem:[%s518 + $0x38] sm:$0xff]
        %v527 = vld [vmem:[%s518 + $0x40] sm:$0xff]
        %v528 = vld [vmem:[%s518 + $0x48] sm:$0xff]
        %v529 = vld [vmem:[%s518 + $0x50] sm:$0xff]
        %v530 = vld [vmem:[%s518 + $0x58] sm:$0xff]
        %v531 = vld [vmem:[%s518 + $0x60] sm:$0xff]
        %v532 = vld [vmem:[%s518 + $0x68] sm:$0xff]
        %v533 = vld [vmem:[%s518 + $0x70] sm:$0xff]
        %v534 = vld [vmem:[%s518 + $0x78] sm:$0xff]
        %535 = vmatprep.subr.mxu0 0.0
        %536 = vmatpush1.msra.mxu0 %v519
        %537 = vmatprep.subr.mxu0 0.0
        %538 = vmatpush1.msra.mxu0 %v520
        %539 = vmatprep.subr.mxu0 0.0
        %540 = vmatpush1.msra.mxu0 %v521
        %541 = vmatprep.subr.mxu0 0.0
        %542 = vmatpush1.msra.mxu0 %v522
        %543 = vmatprep.subr.mxu0 0.0
        %544 = vmatpush1.msra.mxu0 %v523
        %545 = vmatprep.subr.mxu0 0.0
        %546 = vmatpush1.msra.mxu0 %v524
        %547 = vmatprep.subr.mxu0 0.0
        %548 = vmatpush1.msra.mxu0 %v525
        %549 = vmatprep.subr.mxu0 0.0
        %550 = vmatpush1.msra.mxu0 %v526
        %551 = vmatprep.subr.mxu0 0.0
        %552 = vmatpush1.msra.mxu0 %v527
        %553 = vmatprep.subr.mxu0 0.0
        %554 = vmatpush1.msra.mxu0 %v528
        %555 = vmatprep.subr.mxu0 0.0
        %556 = vmatpush1.msra.mxu0 %v529
        %557 = vmatprep.subr.mxu0 0.0
        %558 = vmatpush1.msra.mxu0 %v530
        %559 = vmatprep.subr.mxu0 0.0
        %560 = vmatpush1.msra.mxu0 %v531
        %561 = vmatprep.subr.mxu0 0.0
        %562 = vmatpush1.msra.mxu0 %v532
        %563 = vmatprep.subr.mxu0 0.0
        %564 = vmatpush1.msra.mxu0 %v533
        %565 = vmatprep.subr.mxu0 0.0
        %566 = vmatpush1.msra.mxu0 %v534
        %567 = vmatprep.subr.mxu0 0.0
        %568 = vmatpush1.msra.mxu0 0.0
        %569 = vmatprep.subr.mxu0 0.0
        %570 = vmatpush1.msra.mxu0 0.0
        %571 = vmatprep.subr.mxu0 0.0
        %572 = vmatpush1.msra.mxu0 0.0
        %573 = vmatprep.subr.mxu0 0.0
        %574 = vmatpush1.msra.mxu0 0.0
        %575 = vmatprep.subr.mxu0 0.0
        %576 = vmatpush1.msra.mxu0 0.0
        %577 = vmatprep.subr.mxu0 0.0
        %578 = vmatpush1.msra.mxu0 0.0
        %579 = vmatprep.subr.mxu0 0.0
        %580 = vmatpush1.msra.mxu0 0.0
        %581 = vmatprep.subr.mxu0 0.0
        %582 = vmatpush1.msra.mxu0 0.0
        %583 = vmatprep.subr.mxu0 0.0
        %584 = vmatpush1.msra.mxu0 0.0
        %585 = vmatprep.subr.mxu0 0.0
        %586 = vmatpush1.msra.mxu0 0.0
        %587 = vmatprep.subr.mxu0 0.0
        %588 = vmatpush1.msra.mxu0 0.0
        %589 = vmatprep.subr.mxu0 0.0
        %590 = vmatpush1.msra.mxu0 0.0
        %591 = vmatprep.subr.mxu0 0.0
        %592 = vmatpush1.msra.mxu0 0.0
        %593 = vmatprep.subr.mxu0 0.0
        %594 = vmatpush1.msra.mxu0 0.0
        %595 = vmatprep.subr.mxu0 0.0
        %596 = vmatpush1.msra.mxu0 0.0
        %597 = vmatprep.subr.mxu0 0.0
        %598 = vmatpush1.msra.mxu0 0.0
        %599 = vmatprep.mubr.f32.mxu0 0.0
        %600 = vmatmul.mubr.f32.gmra.mrb[0].mxu0 %v516
        %v601 = vpop.f32.mrb[0].mxu0
        %v602 = vadd.f32 0.0, %v601
        %v603 = vpop.f32.mrb[0].mxu0
        %604 = vmatprep.mubr.f32.mxu0 0.0
        %605 = vmatmul.mubr.f32.gmra.mrb[0].mxu0 %v517
        %v606 = vpop.f32.mrb[0].mxu0
        %v607 = vadd.f32 0.0, %v606
        %v608 = vpop.f32.mrb[0].mxu0
        %609 = vdwg.mxu0
        %v610 = vadd.f32 %v508, %v602
        %v611 = vadd.f32 %v513, %v607
        %v612 = vld [vmem:[%s3] sm:$0x1]
        %v614 = vlaneseq
        %v615 = vshrl.u32 %v614, 7
        %v616 = vsub.s32 0, %v615
        %v617 = vrot.slane %v612, %v616
        %v619 = vadd.f32 %v610, %v617
        %v620 = vadd.f32 %v611, %v617
        %v621 = vmax.f32 %v619, 0.0
        %v622 = vmax.f32 %v620, 0.0
        %623 = vst [vmem:[#allocation2 + $0x1] sm:$0xff] %v621
        %624 = vst [vmem:[#allocation2 + $0x9] sm:$0xff] %v622
        %v625 = vld [vmem:[#allocation2] sm:$0xff]
        %v626 = vld [vmem:[#allocation2 + $0x8] sm:$0xff]
        %s627 = scalar_lea.vmem [#allocation6], 384
        %v628 = vld [vmem:[%s627] sm:$0xff]
        %v629 = vld [vmem:[%s627 + $0x8] sm:$0xff]
        %v630 = vld [vmem:[%s627 + $0x10] sm:$0xff]
        %v631 = vld [vmem:[%s627 + $0x18] sm:$0xff]
        %v632 = vld [vmem:[%s627 + $0x20] sm:$0xff]
        %v633 = vld [vmem:[%s627 + $0x28] sm:$0xff]
        %v634 = vld [vmem:[%s627 + $0x30] sm:$0xff]
        %v635 = vld [vmem:[%s627 + $0x38] sm:$0xff]
        %v636 = vld [vmem:[%s627 + $0x40] sm:$0xff]
        %v637 = vld [vmem:[%s627 + $0x48] sm:$0xff]
        %v638 = vld [vmem:[%s627 + $0x50] sm:$0xff]
        %v639 = vld [vmem:[%s627 + $0x58] sm:$0xff]
        %v640 = vld [vmem:[%s627 + $0x60] sm:$0xff]
        %v641 = vld [vmem:[%s627 + $0x68] sm:$0xff]
        %v642 = vld [vmem:[%s627 + $0x70] sm:$0xff]
        %v643 = vld [vmem:[%s627 + $0x78] sm:$0xff]
        %v644 = vld [vmem:[#allocation2 + $0x1] sm:$0xff]
        %v645 = vld [vmem:[#allocation2 + $0x9] sm:$0xff]
        %s646 = scalar_lea.vmem [#allocation6], 512
        %v647 = vld [vmem:[%s646] sm:$0xff]
        %v648 = vld [vmem:[%s646 + $0x8] sm:$0xff]
        %v649 = vld [vmem:[%s646 + $0x10] sm:$0xff]
        %v650 = vld [vmem:[%s646 + $0x18] sm:$0xff]
        %v651 = vld [vmem:[%s646 + $0x20] sm:$0xff]
        %v652 = vld [vmem:[%s646 + $0x28] sm:$0xff]
        %v653 = vld [vmem:[%s646 + $0x30] sm:$0xff]
        %v654 = vld [vmem:[%s646 + $0x38] sm:$0xff]
        %v655 = vld [vmem:[%s646 + $0x40] sm:$0xff]
        %v656 = vld [vmem:[%s646 + $0x48] sm:$0xff]
        %v657 = vld [vmem:[%s646 + $0x50] sm:$0xff]
        %v658 = vld [vmem:[%s646 + $0x58] sm:$0xff]
        %v659 = vld [vmem:[%s646 + $0x60] sm:$0xff]
        %v660 = vld [vmem:[%s646 + $0x68] sm:$0xff]
        %v661 = vld [vmem:[%s646 + $0x70] sm:$0xff]
        %v662 = vld [vmem:[%s646 + $0x78] sm:$0xff]
        %663 = vmatprep.subr.mxu0 0.0
        %664 = vmatpush1.msra.mxu0 %v647
        %665 = vmatprep.subr.mxu0 0.0
        %666 = vmatpush1.msra.mxu0 %v648
        %667 = vmatprep.subr.mxu0 0.0
        %668 = vmatpush1.msra.mxu0 %v649
        %669 = vmatprep.subr.mxu0 0.0
        %670 = vmatpush1.msra.mxu0 %v650
        %671 = vmatprep.subr.mxu0 0.0
        %672 = vmatpush1.msra.mxu0 %v651
        %673 = vmatprep.subr.mxu0 0.0
        %674 = vmatpush1.msra.mxu0 %v652
        %675 = vmatprep.subr.mxu0 0.0
        %676 = vmatpush1.msra.mxu0 %v653
        %677 = vmatprep.subr.mxu0 0.0
        %678 = vmatpush1.msra.mxu0 %v654
        %679 = vmatprep.subr.mxu0 0.0
        %680 = vmatpush1.msra.mxu0 %v655
        %681 = vmatprep.subr.mxu0 0.0
        %682 = vmatpush1.msra.mxu0 %v656
        %683 = vmatprep.subr.mxu0 0.0
        %684 = vmatpush1.msra.mxu0 %v657
        %685 = vmatprep.subr.mxu0 0.0
        %686 = vmatpush1.msra.mxu0 %v658
        %687 = vmatprep.subr.mxu0 0.0
        %688 = vmatpush1.msra.mxu0 %v659
        %689 = vmatprep.subr.mxu0 0.0
        %690 = vmatpush1.msra.mxu0 %v660
        %691 = vmatprep.subr.mxu0 0.0
        %692 = vmatpush1.msra.mxu0 %v661
        %693 = vmatprep.subr.mxu0 0.0
        %694 = vmatpush1.msra.mxu0 %v662
        %695 = vmatprep.subr.mxu0 0.0
        %696 = vmatpush1.msra.mxu0 0.0
        %697 = vmatprep.subr.mxu0 0.0
        %698 = vmatpush1.msra.mxu0 0.0
        %699 = vmatprep.subr.mxu0 0.0
        %700 = vmatpush1.msra.mxu0 0.0
        %701 = vmatprep.subr.mxu0 0.0
        %702 = vmatpush1.msra.mxu0 0.0
        %703 = vmatprep.subr.mxu0 0.0
        %704 = vmatpush1.msra.mxu0 0.0
        %705 = vmatprep.subr.mxu0 0.0
        %706 = vmatpush1.msra.mxu0 0.0
        %707 = vmatprep.subr.mxu0 0.0
        %708 = vmatpush1.msra.mxu0 0.0
        %709 = vmatprep.subr.mxu0 0.0
        %710 = vmatpush1.msra.mxu0 0.0
        %711 = vmatprep.subr.mxu0 0.0
        %712 = vmatpush1.msra.mxu0 0.0
        %713 = vmatprep.subr.mxu0 0.0
        %714 = vmatpush1.msra.mxu0 0.0
        %715 = vmatprep.subr.mxu0 0.0
        %716 = vmatpush1.msra.mxu0 0.0
        %717 = vmatprep.subr.mxu0 0.0
        %718 = vmatpush1.msra.mxu0 0.0
        %719 = vmatprep.subr.mxu0 0.0
        %720 = vmatpush1.msra.mxu0 0.0
        %721 = vmatprep.subr.mxu0 0.0
        %722 = vmatpush1.msra.mxu0 0.0
        %723 = vmatprep.subr.mxu0 0.0
        %724 = vmatpush1.msra.mxu0 0.0
        %725 = vmatprep.subr.mxu0 0.0
        %726 = vmatpush1.msra.mxu0 0.0
        %727 = vmatprep.mubr.f32.mxu0 0.0
        %728 = vmatmul.mubr.f32.gmra.mrb[0].mxu0 %v644
        %v729 = vpop.f32.mrb[0].mxu0
        %v730 = vadd.f32 0.0, %v729
        %v731 = vpop.f32.mrb[0].mxu0
        %732 = vmatprep.mubr.f32.mxu0 0.0
        %733 = vmatmul.mubr.f32.gmra.mrb[0].mxu0 %v645
        %v734 = vpop.f32.mrb[0].mxu0
        %v735 = vadd.f32 0.0, %v734
        %v736 = vpop.f32.mrb[0].mxu0
        %737 = vdwg.mxu0
        %738 = vmatprep.subr.mxu0 0.0
        %739 = vmatpush1.msra.mxu0 %v628
        %740 = vmatprep.subr.mxu0 0.0
        %741 = vmatpush1.msra.mxu0 %v629
        %742 = vmatprep.subr.mxu0 0.0
        %743 = vmatpush1.msra.mxu0 %v630
        %744 = vmatprep.subr.mxu0 0.0
        %745 = vmatpush1.msra.mxu0 %v631
        %746 = vmatprep.subr.mxu0 0.0
        %747 = vmatpush1.msra.mxu0 %v632
        %748 = vmatprep.subr.mxu0 0.0
        %749 = vmatpush1.msra.mxu0 %v633
        %750 = vmatprep.subr.mxu0 0.0
        %751 = vmatpush1.msra.mxu0 %v634
        %752 = vmatprep.subr.mxu0 0.0
        %753 = vmatpush1.msra.mxu0 %v635
        %754 = vmatprep.subr.mxu0 0.0
        %755 = vmatpush1.msra.mxu0 %v636
        %756 = vmatprep.subr.mxu0 0.0
        %757 = vmatpush1.msra.mxu0 %v637
        %758 = vmatprep.subr.mxu0 0.0
        %759 = vmatpush1.msra.mxu0 %v638
        %760 = vmatprep.subr.mxu0 0.0
        %761 = vmatpush1.msra.mxu0 %v639
        %762 = vmatprep.subr.mxu0 0.0
        %763 = vmatpush1.msra.mxu0 %v640
        %764 = vmatprep.subr.mxu0 0.0
        %765 = vmatpush1.msra.mxu0 %v641
        %766 = vmatprep.subr.mxu0 0.0
        %767 = vmatpush1.msra.mxu0 %v642
        %768 = vmatprep.subr.mxu0 0.0
        %769 = vmatpush1.msra.mxu0 %v643
        %770 = vmatprep.subr.mxu0 0.0
        %771 = vmatpush1.msra.mxu0 0.0
        %772 = vmatprep.subr.mxu0 0.0
        %773 = vmatpush1.msra.mxu0 0.0
        %774 = vmatprep.subr.mxu0 0.0
        %775 = vmatpush1.msra.mxu0 0.0
        %776 = vmatprep.subr.mxu0 0.0
        %777 = vmatpush1.msra.mxu0 0.0
        %778 = vmatprep.subr.mxu0 0.0
        %779 = vmatpush1.msra.mxu0 0.0
        %780 = vmatprep.subr.mxu0 0.0
        %781 = vmatpush1.msra.mxu0 0.0
        %782 = vmatprep.subr.mxu0 0.0
        %783 = vmatpush1.msra.mxu0 0.0
        %784 = vmatprep.subr.mxu0 0.0
        %785 = vmatpush1.msra.mxu0 0.0
        %786 = vmatprep.subr.mxu0 0.0
        %787 = vmatpush1.msra.mxu0 0.0
        %788 = vmatprep.subr.mxu0 0.0
        %789 = vmatpush1.msra.mxu0 0.0
        %790 = vmatprep.subr.mxu0 0.0
        %791 = vmatpush1.msra.mxu0 0.0
        %792 = vmatprep.subr.mxu0 0.0
        %793 = vmatpush1.msra.mxu0 0.0
        %794 = vmatprep.subr.mxu0 0.0
        %795 = vmatpush1.msra.mxu0 0.0
        %796 = vmatprep.subr.mxu0 0.0
        %797 = vmatpush1.msra.mxu0 0.0
        %798 = vmatprep.subr.mxu0 0.0
        %799 = vmatpush1.msra.mxu0 0.0
        %800 = vmatprep.subr.mxu0 0.0
        %801 = vmatpush1.msra.mxu0 0.0
        %802 = vmatprep.mubr.f32.mxu0 0.0
        %803 = vmatmul.mubr.f32.gmra.mrb[0].mxu0 %v625
        %v804 = vpop.f32.mrb[0].mxu0
        %v805 = vadd.f32 %v730, %v804
        %v806 = vpop.f32.mrb[0].mxu0
        %807 = vmatprep.mubr.f32.mxu0 0.0
        %808 = vmatmul.mubr.f32.gmra.mrb[0].mxu0 %v626
        %v809 = vpop.f32.mrb[0].mxu0
        %v810 = vadd.f32 %v735, %v809
        %v811 = vpop.f32.mrb[0].mxu0
        %812 = vdwg.mxu0
        %v813 = vld [vmem:[#allocation2 + $0x2] sm:$0xff]
        %v814 = vld [vmem:[#allocation2 + $0xa] sm:$0xff]
        %s815 = scalar_lea.vmem [#allocation6], 640
        %v816 = vld [vmem:[%s815] sm:$0xff]
        %v817 = vld [vmem:[%s815 + $0x8] sm:$0xff]
        %v818 = vld [vmem:[%s815 + $0x10] sm:$0xff]
        %v819 = vld [vmem:[%s815 + $0x18] sm:$0xff]
        %v820 = vld [vmem:[%s815 + $0x20] sm:$0xff]
        %v821 = vld [vmem:[%s815 + $0x28] sm:$0xff]
        %v822 = vld [vmem:[%s815 + $0x30] sm:$0xff]
        %v823 = vld [vmem:[%s815 + $0x38] sm:$0xff]
        %v824 = vld [vmem:[%s815 + $0x40] sm:$0xff]
        %v825 = vld [vmem:[%s815 + $0x48] sm:$0xff]
        %v826 = vld [vmem:[%s815 + $0x50] sm:$0xff]
        %v827 = vld [vmem:[%s815 + $0x58] sm:$0xff]
        %v828 = vld [vmem:[%s815 + $0x60] sm:$0xff]
        %v829 = vld [vmem:[%s815 + $0x68] sm:$0xff]
        %v830 = vld [vmem:[%s815 + $0x70] sm:$0xff]
        %v831 = vld [vmem:[%s815 + $0x78] sm:$0xff]
        %832 = vmatprep.subr.mxu0 0.0
        %833 = vmatpush1.msra.mxu0 %v816
        %834 = vmatprep.subr.mxu0 0.0
        %835 = vmatpush1.msra.mxu0 %v817
        %836 = vmatprep.subr.mxu0 0.0
        %837 = vmatpush1.msra.mxu0 %v818
        %838 = vmatprep.subr.mxu0 0.0
        %839 = vmatpush1.msra.mxu0 %v819
        %840 = vmatprep.subr.mxu0 0.0
        %841 = vmatpush1.msra.mxu0 %v820
        %842 = vmatprep.subr.mxu0 0.0
        %843 = vmatpush1.msra.mxu0 %v821
        %844 = vmatprep.subr.mxu0 0.0
        %845 = vmatpush1.msra.mxu0 %v822
        %846 = vmatprep.subr.mxu0 0.0
        %847 = vmatpush1.msra.mxu0 %v823
        %848 = vmatprep.subr.mxu0 0.0
        %849 = vmatpush1.msra.mxu0 %v824
        %850 = vmatprep.subr.mxu0 0.0
        %851 = vmatpush1.msra.mxu0 %v825
        %852 = vmatprep.subr.mxu0 0.0
        %853 = vmatpush1.msra.mxu0 %v826
        %854 = vmatprep.subr.mxu0 0.0
        %855 = vmatpush1.msra.mxu0 %v827
        %856 = vmatprep.subr.mxu0 0.0
        %857 = vmatpush1.msra.mxu0 %v828
        %858 = vmatprep.subr.mxu0 0.0
        %859 = vmatpush1.msra.mxu0 %v829
        %860 = vmatprep.subr.mxu0 0.0
        %861 = vmatpush1.msra.mxu0 %v830
        %862 = vmatprep.subr.mxu0 0.0
        %863 = vmatpush1.msra.mxu0 %v831
        %864 = vmatprep.subr.mxu0 0.0
        %865 = vmatpush1.msra.mxu0 0.0
        %866 = vmatprep.subr.mxu0 0.0
        %867 = vmatpush1.msra.mxu0 0.0
        %868 = vmatprep.subr.mxu0 0.0
        %869 = vmatpush1.msra.mxu0 0.0
        %870 = vmatprep.subr.mxu0 0.0
        %871 = vmatpush1.msra.mxu0 0.0
        %872 = vmatprep.subr.mxu0 0.0
        %873 = vmatpush1.msra.mxu0 0.0
        %874 = vmatprep.subr.mxu0 0.0
        %875 = vmatpush1.msra.mxu0 0.0
        %876 = vmatprep.subr.mxu0 0.0
        %877 = vmatpush1.msra.mxu0 0.0
        %878 = vmatprep.subr.mxu0 0.0
        %879 = vmatpush1.msra.mxu0 0.0
        %880 = vmatprep.subr.mxu0 0.0
        %881 = vmatpush1.msra.mxu0 0.0
        %882 = vmatprep.subr.mxu0 0.0
        %883 = vmatpush1.msra.mxu0 0.0
        %884 = vmatprep.subr.mxu0 0.0
        %885 = vmatpush1.msra.mxu0 0.0
        %886 = vmatprep.subr.mxu0 0.0
        %887 = vmatpush1.msra.mxu0 0.0
        %888 = vmatprep.subr.mxu0 0.0
        %889 = vmatpush1.msra.mxu0 0.0
        %890 = vmatprep.subr.mxu0 0.0
        %891 = vmatpush1.msra.mxu0 0.0
        %892 = vmatprep.subr.mxu0 0.0
        %893 = vmatpush1.msra.mxu0 0.0
        %894 = vmatprep.subr.mxu0 0.0
        %895 = vmatpush1.msra.mxu0 0.0
        %896 = vmatprep.mubr.f32.mxu0 0.0
        %897 = vmatmul.mubr.f32.gmra.mrb[0].mxu0 %v813
        %v898 = vpop.f32.mrb[0].mxu0
        %v899 = vadd.f32 0.0, %v898
        %v900 = vpop.f32.mrb[0].mxu0
        %901 = vmatprep.mubr.f32.mxu0 0.0
        %902 = vmatmul.mubr.f32.gmra.mrb[0].mxu0 %v814
        %v903 = vpop.f32.mrb[0].mxu0
        %v904 = vadd.f32 0.0, %v903
        %v905 = vpop.f32.mrb[0].mxu0
        %906 = vdwg.mxu0
        %v907 = vadd.f32 %v805, %v899
        %v908 = vadd.f32 %v810, %v904
        %s909 = scalar_lea.vmem %s3, 1
        %v910 = vld [vmem:[%s909] sm:$0x1]
        %v912 = vlaneseq
        %v913 = vshrl.u32 %v912, 7
        %v914 = vsub.s32 0, %v913
        %v915 = vrot.slane %v910, %v914
        %v917 = vadd.f32 %v907, %v915
        %v918 = vadd.f32 %v908, %v915
        %v919 = vadd.f32 %v917, %v323
        %v920 = vadd.f32 %v918, %v324
        %v921 = vadd.f32 %v321, %v919
        %v922 = vadd.f32 %v322, %v920
        %v923 = vmax.f32 %v921, 0.0
        %v924 = vmax.f32 %v922, 0.0
        %925 = vst [vmem:[#allocation2 + $0x1] sm:$0xff] %v923
        %926 = vst [vmem:[#allocation2 + $0x9] sm:$0xff] %v924
        %v927 = vld [vmem:[#allocation2] sm:$0xff]
        %v928 = vld [vmem:[#allocation2 + $0x8] sm:$0xff]
        %s929 = scalar_lea.vmem [#allocation6], 768
        %v930 = vld [vmem:[%s929] sm:$0xff]
        %v931 = vld [vmem:[%s929 + $0x8] sm:$0xff]
        %v932 = vld [vmem:[%s929 + $0x10] sm:$0xff]
        %v933 = vld [vmem:[%s929 + $0x18] sm:$0xff]
        %v934 = vld [vmem:[%s929 + $0x20] sm:$0xff]
        %v935 = vld [vmem:[%s929 + $0x28] sm:$0xff]
        %v936 = vld [vmem:[%s929 + $0x30] sm:$0xff]
        %v937 = vld [vmem:[%s929 + $0x38] sm:$0xff]
        %v938 = vld [vmem:[%s929 + $0x40] sm:$0xff]
        %v939 = vld [vmem:[%s929 + $0x48] sm:$0xff]
        %v940 = vld [vmem:[%s929 + $0x50] sm:$0xff]
        %v941 = vld [vmem:[%s929 + $0x58] sm:$0xff]
        %v942 = vld [vmem:[%s929 + $0x60] sm:$0xff]
        %v943 = vld [vmem:[%s929 + $0x68] sm:$0xff]
        %v944 = vld [vmem:[%s929 + $0x70] sm:$0xff]
        %v945 = vld [vmem:[%s929 + $0x78] sm:$0xff]
        %v946 = vld [vmem:[#allocation2 + $0x1] sm:$0xff]
        %v947 = vld [vmem:[#allocation2 + $0x9] sm:$0xff]
        %s948 = scalar_lea.vmem [#allocation6], 896
        %v949 = vld [vmem:[%s948] sm:$0xff]
        %v950 = vld [vmem:[%s948 + $0x8] sm:$0xff]
        %v951 = vld [vmem:[%s948 + $0x10] sm:$0xff]
        %v952 = vld [vmem:[%s948 + $0x18] sm:$0xff]
        %v953 = vld [vmem:[%s948 + $0x20] sm:$0xff]
        %v954 = vld [vmem:[%s948 + $0x28] sm:$0xff]
        %v955 = vld [vmem:[%s948 + $0x30] sm:$0xff]
        %v956 = vld [vmem:[%s948 + $0x38] sm:$0xff]
        %v957 = vld [vmem:[%s948 + $0x40] sm:$0xff]
        %v958 = vld [vmem:[%s948 + $0x48] sm:$0xff]
        %v959 = vld [vmem:[%s948 + $0x50] sm:$0xff]
        %v960 = vld [vmem:[%s948 + $0x58] sm:$0xff]
        %v961 = vld [vmem:[%s948 + $0x60] sm:$0xff]
        %v962 = vld [vmem:[%s948 + $0x68] sm:$0xff]
        %v963 = vld [vmem:[%s948 + $0x70] sm:$0xff]
        %v964 = vld [vmem:[%s948 + $0x78] sm:$0xff]
        %965 = vmatprep.subr.mxu0 0.0
        %966 = vmatpush1.msra.mxu0 %v949
        %967 = vmatprep.subr.mxu0 0.0
        %968 = vmatpush1.msra.mxu0 %v950
        %969 = vmatprep.subr.mxu0 0.0
        %970 = vmatpush1.msra.mxu0 %v951
        %971 = vmatprep.subr.mxu0 0.0
        %972 = vmatpush1.msra.mxu0 %v952
        %973 = vmatprep.subr.mxu0 0.0
        %974 = vmatpush1.msra.mxu0 %v953
        %975 = vmatprep.subr.mxu0 0.0
        %976 = vmatpush1.msra.mxu0 %v954
        %977 = vmatprep.subr.mxu0 0.0
        %978 = vmatpush1.msra.mxu0 %v955
        %979 = vmatprep.subr.mxu0 0.0
        %980 = vmatpush1.msra.mxu0 %v956
        %981 = vmatprep.subr.mxu0 0.0
        %982 = vmatpush1.msra.mxu0 %v957
        %983 = vmatprep.subr.mxu0 0.0
        %984 = vmatpush1.msra.mxu0 %v958
        %985 = vmatprep.subr.mxu0 0.0
        %986 = vmatpush1.msra.mxu0 %v959
        %987 = vmatprep.subr.mxu0 0.0
        %988 = vmatpush1.msra.mxu0 %v960
        %989 = vmatprep.subr.mxu0 0.0
        %990 = vmatpush1.msra.mxu0 %v961
        %991 = vmatprep.subr.mxu0 0.0
        %992 = vmatpush1.msra.mxu0 %v962
        %993 = vmatprep.subr.mxu0 0.0
        %994 = vmatpush1.msra.mxu0 %v963
        %995 = vmatprep.subr.mxu0 0.0
        %996 = vmatpush1.msra.mxu0 %v964
        %997 = vmatprep.subr.mxu0 0.0
        %998 = vmatpush1.msra.mxu0 0.0
        %999 = vmatprep.subr.mxu0 0.0
        %1000 = vmatpush1.msra.mxu0 0.0
        %1001 = vmatprep.subr.mxu0 0.0
        %1002 = vmatpush1.msra.mxu0 0.0
        %1003 = vmatprep.subr.mxu0 0.0
        %1004 = vmatpush1.msra.mxu0 0.0
        %1005 = vmatprep.subr.mxu0 0.0
        %1006 = vmatpush1.msra.mxu0 0.0
        %1007 = vmatprep.subr.mxu0 0.0
        %1008 = vmatpush1.msra.mxu0 0.0
        %1009 = vmatprep.subr.mxu0 0.0
        %1010 = vmatpush1.msra.mxu0 0.0
        %1011 = vmatprep.subr.mxu0 0.0
        %1012 = vmatpush1.msra.mxu0 0.0
        %1013 = vmatprep.subr.mxu0 0.0
        %1014 = vmatpush1.msra.mxu0 0.0
        %1015 = vmatprep.subr.mxu0 0.0
        %1016 = vmatpush1.msra.mxu0 0.0
        %1017 = vmatprep.subr.mxu0 0.0
        %1018 = vmatpush1.msra.mxu0 0.0
        %1019 = vmatprep.subr.mxu0 0.0
        %1020 = vmatpush1.msra.mxu0 0.0
        %1021 = vmatprep.subr.mxu0 0.0
        %1022 = vmatpush1.msra.mxu0 0.0
        %1023 = vmatprep.subr.mxu0 0.0
        %1024 = vmatpush1.msra.mxu0 0.0
        %1025 = vmatprep.subr.mxu0 0.0
        %1026 = vmatpush1.msra.mxu0 0.0
        %1027 = vmatprep.subr.mxu0 0.0
        %1028 = vmatpush1.msra.mxu0 0.0
        %1029 = vmatprep.mubr.f32.mxu0 0.0
        %1030 = vmatmul.mubr.f32.gmra.mrb[0].mxu0 %v946
        %v1031 = vpop.f32.mrb[0].mxu0
        %v1032 = vadd.f32 0.0, %v1031
        %v1033 = vpop.f32.mrb[0].mxu0
        %1034 = vmatprep.mubr.f32.mxu0 0.0
        %1035 = vmatmul.mubr.f32.gmra.mrb[0].mxu0 %v947
        %v1036 = vpop.f32.mrb[0].mxu0
        %v1037 = vadd.f32 0.0, %v1036
        %v1038 = vpop.f32.mrb[0].mxu0
        %1039 = vdwg.mxu0
        %1040 = vmatprep.subr.mxu0 0.0
        %1041 = vmatpush1.msra.mxu0 %v930
        %1042 = vmatprep.subr.mxu0 0.0
        %1043 = vmatpush1.msra.mxu0 %v931
        %1044 = vmatprep.subr.mxu0 0.0
        %1045 = vmatpush1.msra.mxu0 %v932
        %1046 = vmatprep.subr.mxu0 0.0
        %1047 = vmatpush1.msra.mxu0 %v933
        %1048 = vmatprep.subr.mxu0 0.0
        %1049 = vmatpush1.msra.mxu0 %v934
        %1050 = vmatprep.subr.mxu0 0.0
        %1051 = vmatpush1.msra.mxu0 %v935
        %1052 = vmatprep.subr.mxu0 0.0
        %1053 = vmatpush1.msra.mxu0 %v936
        %1054 = vmatprep.subr.mxu0 0.0
        %1055 = vmatpush1.msra.mxu0 %v937
        %1056 = vmatprep.subr.mxu0 0.0
        %1057 = vmatpush1.msra.mxu0 %v938
        %1058 = vmatprep.subr.mxu0 0.0
        %1059 = vmatpush1.msra.mxu0 %v939
        %1060 = vmatprep.subr.mxu0 0.0
        %1061 = vmatpush1.msra.mxu0 %v940
        %1062 = vmatprep.subr.mxu0 0.0
        %1063 = vmatpush1.msra.mxu0 %v941
        %1064 = vmatprep.subr.mxu0 0.0
        %1065 = vmatpush1.msra.mxu0 %v942
        %1066 = vmatprep.subr.mxu0 0.0
        %1067 = vmatpush1.msra.mxu0 %v943
        %1068 = vmatprep.subr.mxu0 0.0
        %1069 = vmatpush1.msra.mxu0 %v944
        %1070 = vmatprep.subr.mxu0 0.0
        %1071 = vmatpush1.msra.mxu0 %v945
        %1072 = vmatprep.subr.mxu0 0.0
        %1073 = vmatpush1.msra.mxu0 0.0
        %1074 = vmatprep.subr.mxu0 0.0
        %1075 = vmatpush1.msra.mxu0 0.0
        %1076 = vmatprep.subr.mxu0 0.0
        %1077 = vmatpush1.msra.mxu0 0.0
        %1078 = vmatprep.subr.mxu0 0.0
        %1079 = vmatpush1.msra.mxu0 0.0
        %1080 = vmatprep.subr.mxu0 0.0
        %1081 = vmatpush1.msra.mxu0 0.0
        %1082 = vmatprep.subr.mxu0 0.0
        %1083 = vmatpush1.msra.mxu0 0.0
        %1084 = vmatprep.subr.mxu0 0.0
        %1085 = vmatpush1.msra.mxu0 0.0
        %1086 = vmatprep.subr.mxu0 0.0
        %1087 = vmatpush1.msra.mxu0 0.0
        %1088 = vmatprep.subr.mxu0 0.0
        %1089 = vmatpush1.msra.mxu0 0.0
        %1090 = vmatprep.subr.mxu0 0.0
        %1091 = vmatpush1.msra.mxu0 0.0
        %1092 = vmatprep.subr.mxu0 0.0
        %1093 = vmatpush1.msra.mxu0 0.0
        %1094 = vmatprep.subr.mxu0 0.0
        %1095 = vmatpush1.msra.mxu0 0.0
        %1096 = vmatprep.subr.mxu0 0.0
        %1097 = vmatpush1.msra.mxu0 0.0
        %1098 = vmatprep.subr.mxu0 0.0
        %1099 = vmatpush1.msra.mxu0 0.0
        %1100 = vmatprep.subr.mxu0 0.0
        %1101 = vmatpush1.msra.mxu0 0.0
        %1102 = vmatprep.subr.mxu0 0.0
        %1103 = vmatpush1.msra.mxu0 0.0
        %1104 = vmatprep.mubr.f32.mxu0 0.0
        %1105 = vmatmul.mubr.f32.gmra.mrb[0].mxu0 %v927
        %v1106 = vpop.f32.mrb[0].mxu0
        %v1107 = vadd.f32 %v1032, %v1106
        %v1108 = vpop.f32.mrb[0].mxu0
        %1109 = vmatprep.mubr.f32.mxu0 0.0
        %1110 = vmatmul.mubr.f32.gmra.mrb[0].mxu0 %v928
        %v1111 = vpop.f32.mrb[0].mxu0
        %v1112 = vadd.f32 %v1037, %v1111
        %v1113 = vpop.f32.mrb[0].mxu0
        %1114 = vdwg.mxu0
        %v1115 = vld [vmem:[#allocation2 + $0x2] sm:$0xff]
        %v1116 = vld [vmem:[#allocation2 + $0xa] sm:$0xff]
        %s1117 = scalar_lea.vmem [#allocation6], 1024
        %v1118 = vld [vmem:[%s1117] sm:$0xff]
        %v1119 = vld [vmem:[%s1117 + $0x8] sm:$0xff]
        %v1120 = vld [vmem:[%s1117 + $0x10] sm:$0xff]
        %v1121 = vld [vmem:[%s1117 + $0x18] sm:$0xff]
        %v1122 = vld [vmem:[%s1117 + $0x20] sm:$0xff]
        %v1123 = vld [vmem:[%s1117 + $0x28] sm:$0xff]
        %v1124 = vld [vmem:[%s1117 + $0x30] sm:$0xff]
        %v1125 = vld [vmem:[%s1117 + $0x38] sm:$0xff]
        %v1126 = vld [vmem:[%s1117 + $0x40] sm:$0xff]
        %v1127 = vld [vmem:[%s1117 + $0x48] sm:$0xff]
        %v1128 = vld [vmem:[%s1117 + $0x50] sm:$0xff]
        %v1129 = vld [vmem:[%s1117 + $0x58] sm:$0xff]
        %v1130 = vld [vmem:[%s1117 + $0x60] sm:$0xff]
        %v1131 = vld [vmem:[%s1117 + $0x68] sm:$0xff]
        %v1132 = vld [vmem:[%s1117 + $0x70] sm:$0xff]
        %v1133 = vld [vmem:[%s1117 + $0x78] sm:$0xff]
        %1134 = vmatprep.subr.mxu0 0.0
        %1135 = vmatpush1.msra.mxu0 %v1118
        %1136 = vmatprep.subr.mxu0 0.0
        %1137 = vmatpush1.msra.mxu0 %v1119
        %1138 = vmatprep.subr.mxu0 0.0
        %1139 = vmatpush1.msra.mxu0 %v1120
        %1140 = vmatprep.subr.mxu0 0.0
        %1141 = vmatpush1.msra.mxu0 %v1121
        %1142 = vmatprep.subr.mxu0 0.0
        %1143 = vmatpush1.msra.mxu0 %v1122
        %1144 = vmatprep.subr.mxu0 0.0
        %1145 = vmatpush1.msra.mxu0 %v1123
        %1146 = vmatprep.subr.mxu0 0.0
        %1147 = vmatpush1.msra.mxu0 %v1124
        %1148 = vmatprep.subr.mxu0 0.0
        %1149 = vmatpush1.msra.mxu0 %v1125
        %1150 = vmatprep.subr.mxu0 0.0
        %1151 = vmatpush1.msra.mxu0 %v1126
        %1152 = vmatprep.subr.mxu0 0.0
        %1153 = vmatpush1.msra.mxu0 %v1127
        %1154 = vmatprep.subr.mxu0 0.0
        %1155 = vmatpush1.msra.mxu0 %v1128
        %1156 = vmatprep.subr.mxu0 0.0
        %1157 = vmatpush1.msra.mxu0 %v1129
        %1158 = vmatprep.subr.mxu0 0.0
        %1159 = vmatpush1.msra.mxu0 %v1130
        %1160 = vmatprep.subr.mxu0 0.0
        %1161 = vmatpush1.msra.mxu0 %v1131
        %1162 = vmatprep.subr.mxu0 0.0
        %1163 = vmatpush1.msra.mxu0 %v1132
        %1164 = vmatprep.subr.mxu0 0.0
        %1165 = vmatpush1.msra.mxu0 %v1133
        %1166 = vmatprep.subr.mxu0 0.0
        %1167 = vmatpush1.msra.mxu0 0.0
        %1168 = vmatprep.subr.mxu0 0.0
        %1169 = vmatpush1.msra.mxu0 0.0
        %1170 = vmatprep.subr.mxu0 0.0
        %1171 = vmatpush1.msra.mxu0 0.0
        %1172 = vmatprep.subr.mxu0 0.0
        %1173 = vmatpush1.msra.mxu0 0.0
        %1174 = vmatprep.subr.mxu0 0.0
        %1175 = vmatpush1.msra.mxu0 0.0
        %1176 = vmatprep.subr.mxu0 0.0
        %1177 = vmatpush1.msra.mxu0 0.0
        %1178 = vmatprep.subr.mxu0 0.0
        %1179 = vmatpush1.msra.mxu0 0.0
        %1180 = vmatprep.subr.mxu0 0.0
        %1181 = vmatpush1.msra.mxu0 0.0
        %1182 = vmatprep.subr.mxu0 0.0
        %1183 = vmatpush1.msra.mxu0 0.0
        %1184 = vmatprep.subr.mxu0 0.0
        %1185 = vmatpush1.msra.mxu0 0.0
        %1186 = vmatprep.subr.mxu0 0.0
        %1187 = vmatpush1.msra.mxu0 0.0
        %1188 = vmatprep.subr.mxu0 0.0
        %1189 = vmatpush1.msra.mxu0 0.0
        %1190 = vmatprep.subr.mxu0 0.0
        %1191 = vmatpush1.msra.mxu0 0.0
        %1192 = vmatprep.subr.mxu0 0.0
        %1193 = vmatpush1.msra.mxu0 0.0
        %1194 = vmatprep.subr.mxu0 0.0
        %1195 = vmatpush1.msra.mxu0 0.0
        %1196 = vmatprep.subr.mxu0 0.0
        %1197 = vmatpush1.msra.mxu0 0.0
        %1198 = vmatprep.mubr.f32.mxu0 0.0
        %1199 = vmatmul.mubr.f32.gmra.mrb[0].mxu0 %v1115
        %v1200 = vpop.f32.mrb[0].mxu0
        %v1201 = vadd.f32 0.0, %v1200
        %v1202 = vpop.f32.mrb[0].mxu0
        %1203 = vmatprep.mubr.f32.mxu0 0.0
        %1204 = vmatmul.mubr.f32.gmra.mrb[0].mxu0 %v1116
        %v1205 = vpop.f32.mrb[0].mxu0
        %v1206 = vadd.f32 0.0, %v1205
        %v1207 = vpop.f32.mrb[0].mxu0
        %1208 = vdwg.mxu0
        %v1209 = vadd.f32 %v1107, %v1201
        %v1210 = vadd.f32 %v1112, %v1206
        %s1211 = scalar_lea.vmem %s3, 2
        %v1212 = vld [vmem:[%s1211] sm:$0x1]
        %v1214 = vlaneseq
        %v1215 = vshrl.u32 %v1214, 7
        %v1216 = vsub.s32 0, %v1215
        %v1217 = vrot.slane %v1212, %v1216
        %v1219 = vadd.f32 %v1209, %v1217
        %v1220 = vadd.f32 %v1210, %v1217
        %v1221 = vmax.f32 %v1219, 0.0
        %v1222 = vmax.f32 %v1220, 0.0
        %1223 = vst [vmem:[#allocation2 + $0x1] sm:$0xff] %v1221
        %1224 = vst [vmem:[#allocation2 + $0x9] sm:$0xff] %v1222
        %v1225 = vld [vmem:[#allocation2] sm:$0xff]
        %v1226 = vld [vmem:[#allocation2 + $0x8] sm:$0xff]
        %s1227 = scalar_lea.vmem [#allocation6], 1152
        %v1228 = vld [vmem:[%s1227] sm:$0xff]
        %v1229 = vld [vmem:[%s1227 + $0x8] sm:$0xff]
        %v1230 = vld [vmem:[%s1227 + $0x10] sm:$0xff]
        %v1231 = vld [vmem:[%s1227 + $0x18] sm:$0xff]
        %v1232 = vld [vmem:[%s1227 + $0x20] sm:$0xff]
        %v1233 = vld [vmem:[%s1227 + $0x28] sm:$0xff]
        %v1234 = vld [vmem:[%s1227 + $0x30] sm:$0xff]
        %v1235 = vld [vmem:[%s1227 + $0x38] sm:$0xff]
        %v1236 = vld [vmem:[%s1227 + $0x40] sm:$0xff]
        %v1237 = vld [vmem:[%s1227 + $0x48] sm:$0xff]
        %v1238 = vld [vmem:[%s1227 + $0x50] sm:$0xff]
        %v1239 = vld [vmem:[%s1227 + $0x58] sm:$0xff]
        %v1240 = vld [vmem:[%s1227 + $0x60] sm:$0xff]
        %v1241 = vld [vmem:[%s1227 + $0x68] sm:$0xff]
        %v1242 = vld [vmem:[%s1227 + $0x70] sm:$0xff]
        %v1243 = vld [vmem:[%s1227 + $0x78] sm:$0xff]
        %v1244 = vld [vmem:[#allocation2 + $0x1] sm:$0xff]
        %v1245 = vld [vmem:[#allocation2 + $0x9] sm:$0xff]
        %s1246 = scalar_lea.vmem [#allocation6], 1280
        %v1247 = vld [vmem:[%s1246] sm:$0xff]
        %v1248 = vld [vmem:[%s1246 + $0x8] sm:$0xff]
        %v1249 = vld [vmem:[%s1246 + $0x10] sm:$0xff]
        %v1250 = vld [vmem:[%s1246 + $0x18] sm:$0xff]
        %v1251 = vld [vmem:[%s1246 + $0x20] sm:$0xff]
        %v1252 = vld [vmem:[%s1246 + $0x28] sm:$0xff]
        %v1253 = vld [vmem:[%s1246 + $0x30] sm:$0xff]
        %v1254 = vld [vmem:[%s1246 + $0x38] sm:$0xff]
        %v1255 = vld [vmem:[%s1246 + $0x40] sm:$0xff]
        %v1256 = vld [vmem:[%s1246 + $0x48] sm:$0xff]
        %v1257 = vld [vmem:[%s1246 + $0x50] sm:$0xff]
        %v1258 = vld [vmem:[%s1246 + $0x58] sm:$0xff]
        %v1259 = vld [vmem:[%s1246 + $0x60] sm:$0xff]
        %v1260 = vld [vmem:[%s1246 + $0x68] sm:$0xff]
        %v1261 = vld [vmem:[%s1246 + $0x70] sm:$0xff]
        %v1262 = vld [vmem:[%s1246 + $0x78] sm:$0xff]
        %1263 = vmatprep.subr.mxu0 0.0
        %1264 = vmatpush1.msra.mxu0 %v1247
        %1265 = vmatprep.subr.mxu0 0.0
        %1266 = vmatpush1.msra.mxu0 %v1248
        %1267 = vmatprep.subr.mxu0 0.0
        %1268 = vmatpush1.msra.mxu0 %v1249
        %1269 = vmatprep.subr.mxu0 0.0
        %1270 = vmatpush1.msra.mxu0 %v1250
        %1271 = vmatprep.subr.mxu0 0.0
        %1272 = vmatpush1.msra.mxu0 %v1251
        %1273 = vmatprep.subr.mxu0 0.0
        %1274 = vmatpush1.msra.mxu0 %v1252
        %1275 = vmatprep.subr.mxu0 0.0
        %1276 = vmatpush1.msra.mxu0 %v1253
        %1277 = vmatprep.subr.mxu0 0.0
        %1278 = vmatpush1.msra.mxu0 %v1254
        %1279 = vmatprep.subr.mxu0 0.0
        %1280 = vmatpush1.msra.mxu0 %v1255
        %1281 = vmatprep.subr.mxu0 0.0
        %1282 = vmatpush1.msra.mxu0 %v1256
        %1283 = vmatprep.subr.mxu0 0.0
        %1284 = vmatpush1.msra.mxu0 %v1257
        %1285 = vmatprep.subr.mxu0 0.0
        %1286 = vmatpush1.msra.mxu0 %v1258
        %1287 = vmatprep.subr.mxu0 0.0
        %1288 = vmatpush1.msra.mxu0 %v1259
        %1289 = vmatprep.subr.mxu0 0.0
        %1290 = vmatpush1.msra.mxu0 %v1260
        %1291 = vmatprep.subr.mxu0 0.0
        %1292 = vmatpush1.msra.mxu0 %v1261
        %1293 = vmatprep.subr.mxu0 0.0
        %1294 = vmatpush1.msra.mxu0 %v1262
        %1295 = vmatprep.subr.mxu0 0.0
        %1296 = vmatpush1.msra.mxu0 0.0
        %1297 = vmatprep.subr.mxu0 0.0
        %1298 = vmatpush1.msra.mxu0 0.0
        %1299 = vmatprep.subr.mxu0 0.0
        %1300 = vmatpush1.msra.mxu0 0.0
        %1301 = vmatprep.subr.mxu0 0.0
        %1302 = vmatpush1.msra.mxu0 0.0
        %1303 = vmatprep.subr.mxu0 0.0
        %1304 = vmatpush1.msra.mxu0 0.0
        %1305 = vmatprep.subr.mxu0 0.0
        %1306 = vmatpush1.msra.mxu0 0.0
        %1307 = vmatprep.subr.mxu0 0.0
        %1308 = vmatpush1.msra.mxu0 0.0
        %1309 = vmatprep.subr.mxu0 0.0
        %1310 = vmatpush1.msra.mxu0 0.0
        %1311 = vmatprep.subr.mxu0 0.0
        %1312 = vmatpush1.msra.mxu0 0.0
        %1313 = vmatprep.subr.mxu0 0.0
        %1314 = vmatpush1.msra.mxu0 0.0
        %1315 = vmatprep.subr.mxu0 0.0
        %1316 = vmatpush1.msra.mxu0 0.0
        %1317 = vmatprep.subr.mxu0 0.0
        %1318 = vmatpush1.msra.mxu0 0.0
        %1319 = vmatprep.subr.mxu0 0.0
        %1320 = vmatpush1.msra.mxu0 0.0
        %1321 = vmatprep.subr.mxu0 0.0
        %1322 = vmatpush1.msra.mxu0 0.0
        %1323 = vmatprep.subr.mxu0 0.0
        %1324 = vmatpush1.msra.mxu0 0.0
        %1325 = vmatprep.subr.mxu0 0.0
        %1326 = vmatpush1.msra.mxu0 0.0
        %1327 = vmatprep.mubr.f32.mxu0 0.0
        %1328 = vmatmul.mubr.f32.gmra.mrb[0].mxu0 %v1244
        %v1329 = vpop.f32.mrb[0].mxu0
        %v1330 = vadd.f32 0.0, %v1329
        %v1331 = vpop.f32.mrb[0].mxu0
        %1332 = vmatprep.mubr.f32.mxu0 0.0
        %1333 = vmatmul.mubr.f32.gmra.mrb[0].mxu0 %v1245
        %v1334 = vpop.f32.mrb[0].mxu0
        %v1335 = vadd.f32 0.0, %v1334
        %v1336 = vpop.f32.mrb[0].mxu0
        %1337 = vdwg.mxu0
        %1338 = vmatprep.subr.mxu0 0.0
        %1339 = vmatpush1.msra.mxu0 %v1228
        %1340 = vmatprep.subr.mxu0 0.0
        %1341 = vmatpush1.msra.mxu0 %v1229
        %1342 = vmatprep.subr.mxu0 0.0
        %1343 = vmatpush1.msra.mxu0 %v1230
        %1344 = vmatprep.subr.mxu0 0.0
        %1345 = vmatpush1.msra.mxu0 %v1231
        %1346 = vmatprep.subr.mxu0 0.0
        %1347 = vmatpush1.msra.mxu0 %v1232
        %1348 = vmatprep.subr.mxu0 0.0
        %1349 = vmatpush1.msra.mxu0 %v1233
        %1350 = vmatprep.subr.mxu0 0.0
        %1351 = vmatpush1.msra.mxu0 %v1234
        %1352 = vmatprep.subr.mxu0 0.0
        %1353 = vmatpush1.msra.mxu0 %v1235
        %1354 = vmatprep.subr.mxu0 0.0
        %1355 = vmatpush1.msra.mxu0 %v1236
        %1356 = vmatprep.subr.mxu0 0.0
        %1357 = vmatpush1.msra.mxu0 %v1237
        %1358 = vmatprep.subr.mxu0 0.0
        %1359 = vmatpush1.msra.mxu0 %v1238
        %1360 = vmatprep.subr.mxu0 0.0
        %1361 = vmatpush1.msra.mxu0 %v1239
        %1362 = vmatprep.subr.mxu0 0.0
        %1363 = vmatpush1.msra.mxu0 %v1240
        %1364 = vmatprep.subr.mxu0 0.0
        %1365 = vmatpush1.msra.mxu0 %v1241
        %1366 = vmatprep.subr.mxu0 0.0
        %1367 = vmatpush1.msra.mxu0 %v1242
        %1368 = vmatprep.subr.mxu0 0.0
        %1369 = vmatpush1.msra.mxu0 %v1243
        %1370 = vmatprep.subr.mxu0 0.0
        %1371 = vmatpush1.msra.mxu0 0.0
        %1372 = vmatprep.subr.mxu0 0.0
        %1373 = vmatpush1.msra.mxu0 0.0
        %1374 = vmatprep.subr.mxu0 0.0
        %1375 = vmatpush1.msra.mxu0 0.0
        %1376 = vmatprep.subr.mxu0 0.0
        %1377 = vmatpush1.msra.mxu0 0.0
        %1378 = vmatprep.subr.mxu0 0.0
        %1379 = vmatpush1.msra.mxu0 0.0
        %1380 = vmatprep.subr.mxu0 0.0
        %1381 = vmatpush1.msra.mxu0 0.0
        %1382 = vmatprep.subr.mxu0 0.0
        %1383 = vmatpush1.msra.mxu0 0.0
        %1384 = vmatprep.subr.mxu0 0.0
        %1385 = vmatpush1.msra.mxu0 0.0
        %1386 = vmatprep.subr.mxu0 0.0
        %1387 = vmatpush1.msra.mxu0 0.0
        %1388 = vmatprep.subr.mxu0 0.0
        %1389 = vmatpush1.msra.mxu0 0.0
        %1390 = vmatprep.subr.mxu0 0.0
        %1391 = vmatpush1.msra.mxu0 0.0
        %1392 = vmatprep.subr.mxu0 0.0
        %1393 = vmatpush1.msra.mxu0 0.0
        %1394 = vmatprep.subr.mxu0 0.0
        %1395 = vmatpush1.msra.mxu0 0.0
        %1396 = vmatprep.subr.mxu0 0.0
        %1397 = vmatpush1.msra.mxu0 0.0
        %1398 = vmatprep.subr.mxu0 0.0
        %1399 = vmatpush1.msra.mxu0 0.0
        %1400 = vmatprep.subr.mxu0 0.0
        %1401 = vmatpush1.msra.mxu0 0.0
        %1402 = vmatprep.mubr.f32.mxu0 0.0
        %1403 = vmatmul.mubr.f32.gmra.mrb[0].mxu0 %v1225
        %v1404 = vpop.f32.mrb[0].mxu0
        %v1405 = vadd.f32 %v1330, %v1404
        %v1406 = vpop.f32.mrb[0].mxu0
        %1407 = vmatprep.mubr.f32.mxu0 0.0
        %1408 = vmatmul.mubr.f32.gmra.mrb[0].mxu0 %v1226
        %v1409 = vpop.f32.mrb[0].mxu0
        %v1410 = vadd.f32 %v1335, %v1409
        %v1411 = vpop.f32.mrb[0].mxu0
        %1412 = vdwg.mxu0
        %v1413 = vld [vmem:[#allocation2 + $0x2] sm:$0xff]
        %v1414 = vld [vmem:[#allocation2 + $0xa] sm:$0xff]
        %s1415 = scalar_lea.vmem [#allocation6], 1408
        %v1416 = vld [vmem:[%s1415] sm:$0xff]
        %v1417 = vld [vmem:[%s1415 + $0x8] sm:$0xff]
        %v1418 = vld [vmem:[%s1415 + $0x10] sm:$0xff]
        %v1419 = vld [vmem:[%s1415 + $0x18] sm:$0xff]
        %v1420 = vld [vmem:[%s1415 + $0x20] sm:$0xff]
        %v1421 = vld [vmem:[%s1415 + $0x28] sm:$0xff]
        %v1422 = vld [vmem:[%s1415 + $0x30] sm:$0xff]
        %v1423 = vld [vmem:[%s1415 + $0x38] sm:$0xff]
        %v1424 = vld [vmem:[%s1415 + $0x40] sm:$0xff]
        %v1425 = vld [vmem:[%s1415 + $0x48] sm:$0xff]
        %v1426 = vld [vmem:[%s1415 + $0x50] sm:$0xff]
        %v1427 = vld [vmem:[%s1415 + $0x58] sm:$0xff]
        %v1428 = vld [vmem:[%s1415 + $0x60] sm:$0xff]
        %v1429 = vld [vmem:[%s1415 + $0x68] sm:$0xff]
        %v1430 = vld [vmem:[%s1415 + $0x70] sm:$0xff]
        %v1431 = vld [vmem:[%s1415 + $0x78] sm:$0xff]
        %1432 = vmatprep.subr.mxu0 0.0
        %1433 = vmatpush1.msra.mxu0 %v1416
        %1434 = vmatprep.subr.mxu0 0.0
        %1435 = vmatpush1.msra.mxu0 %v1417
        %1436 = vmatprep.subr.mxu0 0.0
        %1437 = vmatpush1.msra.mxu0 %v1418
        %1438 = vmatprep.subr.mxu0 0.0
        %1439 = vmatpush1.msra.mxu0 %v1419
        %1440 = vmatprep.subr.mxu0 0.0
        %1441 = vmatpush1.msra.mxu0 %v1420
        %1442 = vmatprep.subr.mxu0 0.0
        %1443 = vmatpush1.msra.mxu0 %v1421
        %1444 = vmatprep.subr.mxu0 0.0
        %1445 = vmatpush1.msra.mxu0 %v1422
        %1446 = vmatprep.subr.mxu0 0.0
        %1447 = vmatpush1.msra.mxu0 %v1423
        %1448 = vmatprep.subr.mxu0 0.0
        %1449 = vmatpush1.msra.mxu0 %v1424
        %1450 = vmatprep.subr.mxu0 0.0
        %1451 = vmatpush1.msra.mxu0 %v1425
        %1452 = vmatprep.subr.mxu0 0.0
        %1453 = vmatpush1.msra.mxu0 %v1426
        %1454 = vmatprep.subr.mxu0 0.0
        %1455 = vmatpush1.msra.mxu0 %v1427
        %1456 = vmatprep.subr.mxu0 0.0
        %1457 = vmatpush1.msra.mxu0 %v1428
        %1458 = vmatprep.subr.mxu0 0.0
        %1459 = vmatpush1.msra.mxu0 %v1429
        %1460 = vmatprep.subr.mxu0 0.0
        %1461 = vmatpush1.msra.mxu0 %v1430
        %1462 = vmatprep.subr.mxu0 0.0
        %1463 = vmatpush1.msra.mxu0 %v1431
        %1464 = vmatprep.subr.mxu0 0.0
        %1465 = vmatpush1.msra.mxu0 0.0
        %1466 = vmatprep.subr.mxu0 0.0
        %1467 = vmatpush1.msra.mxu0 0.0
        %1468 = vmatprep.subr.mxu0 0.0
        %1469 = vmatpush1.msra.mxu0 0.0
        %1470 = vmatprep.subr.mxu0 0.0
        %1471 = vmatpush1.msra.mxu0 0.0
        %1472 = vmatprep.subr.mxu0 0.0
        %1473 = vmatpush1.msra.mxu0 0.0
        %1474 = vmatprep.subr.mxu0 0.0
        %1475 = vmatpush1.msra.mxu0 0.0
        %1476 = vmatprep.subr.mxu0 0.0
        %1477 = vmatpush1.msra.mxu0 0.0
        %1478 = vmatprep.subr.mxu0 0.0
        %1479 = vmatpush1.msra.mxu0 0.0
        %1480 = vmatprep.subr.mxu0 0.0
        %1481 = vmatpush1.msra.mxu0 0.0
        %1482 = vmatprep.subr.mxu0 0.0
        %1483 = vmatpush1.msra.mxu0 0.0
        %1484 = vmatprep.subr.mxu0 0.0
        %1485 = vmatpush1.msra.mxu0 0.0
        %1486 = vmatprep.subr.mxu0 0.0
        %1487 = vmatpush1.msra.mxu0 0.0
        %1488 = vmatprep.subr.mxu0 0.0
        %1489 = vmatpush1.msra.mxu0 0.0
        %1490 = vmatprep.subr.mxu0 0.0
        %1491 = vmatpush1.msra.mxu0 0.0
        %1492 = vmatprep.subr.mxu0 0.0
        %1493 = vmatpush1.msra.mxu0 0.0
        %1494 = vmatprep.subr.mxu0 0.0
        %1495 = vmatpush1.msra.mxu0 0.0
        %1496 = vmatprep.mubr.f32.mxu0 0.0
        %1497 = vmatmul.mubr.f32.gmra.mrb[0].mxu0 %v1413
        %v1498 = vpop.f32.mrb[0].mxu0
        %v1499 = vadd.f32 0.0, %v1498
        %v1500 = vpop.f32.mrb[0].mxu0
        %1501 = vmatprep.mubr.f32.mxu0 0.0
        %1502 = vmatmul.mubr.f32.gmra.mrb[0].mxu0 %v1414
        %v1503 = vpop.f32.mrb[0].mxu0
        %v1504 = vadd.f32 0.0, %v1503
        %v1505 = vpop.f32.mrb[0].mxu0
        %1506 = vdwg.mxu0
        %v1507 = vadd.f32 %v1405, %v1499
        %v1508 = vadd.f32 %v1410, %v1504
        %s1509 = scalar_lea.vmem %s3, 3
        %v1510 = vld [vmem:[%s1509] sm:$0x1]
        %v1512 = vlaneseq
        %v1513 = vshrl.u32 %v1512, 7
        %v1514 = vsub.s32 0, %v1513
        %v1515 = vrot.slane %v1510, %v1514
        %v1517 = vadd.f32 %v1507, %v1515
        %v1518 = vadd.f32 %v1508, %v1515
        %v1519 = vadd.f32 %v1517, %v921
        %v1520 = vadd.f32 %v1518, %v922
        %v1521 = vld [vmem:[%s4] sm:$0xff]
        %v1522 = vld [vmem:[%s4 + $0x8] sm:$0xff]
        %v1523 = vld [vmem:[%s4 + $0x10] sm:$0xff]
        %v1524 = vld [vmem:[%s4 + $0x18] sm:$0xff]
        %vm1525 = vcmask 130048
        %v1527 = vsel %vm1525, %v1521, 0
        %v1530 = vsel %vm1525, %v1522, 0
        %v1533 = vsel %vm1525, %v1523, 0
        %v1536 = vsel %vm1525, %v1524, 0
        %1538 = vmatprep.subr.mxu0 0.0
        %1539 = vmatpush1.msra.mxu0 %v1519
        %1540 = vmatprep.subr.mxu0 0.0
        %1541 = vmatpush1.msra.mxu0 %v1520
        %1542 = vmatprep.subr.mxu0 0.0
        %1543 = vmatpush1.msra.mxu0 0.0
        %1544 = vmatprep.subr.mxu0 0.0
        %1545 = vmatpush1.msra.mxu0 0.0
        %1546 = vmatprep.subr.mxu0 0.0
        %1547 = vmatpush1.msra.mxu0 0.0
        %1548 = vmatprep.subr.mxu0 0.0
        %1549 = vmatpush1.msra.mxu0 0.0
        %1550 = vmatprep.subr.mxu0 0.0
        %1551 = vmatpush1.msra.mxu0 0.0
        %1552 = vmatprep.subr.mxu0 0.0
        %1553 = vmatpush1.msra.mxu0 0.0
        %1554 = vmatprep.subr.mxu0 0.0
        %1555 = vmatpush1.msra.mxu0 0.0
        %1556 = vmatprep.subr.mxu0 0.0
        %1557 = vmatpush1.msra.mxu0 0.0
        %1558 = vmatprep.subr.mxu0 0.0
        %1559 = vmatpush1.msra.mxu0 0.0
        %1560 = vmatprep.subr.mxu0 0.0
        %1561 = vmatpush1.msra.mxu0 0.0
        %1562 = vmatprep.subr.mxu0 0.0
        %1563 = vmatpush1.msra.mxu0 0.0
        %1564 = vmatprep.subr.mxu0 0.0
        %1565 = vmatpush1.msra.mxu0 0.0
        %1566 = vmatprep.subr.mxu0 0.0
        %1567 = vmatpush1.msra.mxu0 0.0
        %1568 = vmatprep.subr.mxu0 0.0
        %1569 = vmatpush1.msra.mxu0 0.0
        %1570 = vmatprep.subr.mxu0 0.0
        %1571 = vmatpush1.msra.mxu0 0.0
        %1572 = vmatprep.subr.mxu0 0.0
        %1573 = vmatpush1.msra.mxu0 0.0
        %1574 = vmatprep.subr.mxu0 0.0
        %1575 = vmatpush1.msra.mxu0 0.0
        %1576 = vmatprep.subr.mxu0 0.0
        %1577 = vmatpush1.msra.mxu0 0.0
        %1578 = vmatprep.subr.mxu0 0.0
        %1579 = vmatpush1.msra.mxu0 0.0
        %1580 = vmatprep.subr.mxu0 0.0
        %1581 = vmatpush1.msra.mxu0 0.0
        %1582 = vmatprep.subr.mxu0 0.0
        %1583 = vmatpush1.msra.mxu0 0.0
        %1584 = vmatprep.subr.mxu0 0.0
        %1585 = vmatpush1.msra.mxu0 0.0
        %1586 = vmatprep.subr.mxu0 0.0
        %1587 = vmatpush1.msra.mxu0 0.0
        %1588 = vmatprep.subr.mxu0 0.0
        %1589 = vmatpush1.msra.mxu0 0.0
        %1590 = vmatprep.subr.mxu0 0.0
        %1591 = vmatpush1.msra.mxu0 0.0
        %1592 = vmatprep.subr.mxu0 0.0
        %1593 = vmatpush1.msra.mxu0 0.0
        %1594 = vmatprep.subr.mxu0 0.0
        %1595 = vmatpush1.msra.mxu0 0.0
        %1596 = vmatprep.subr.mxu0 0.0
        %1597 = vmatpush1.msra.mxu0 0.0
        %1598 = vmatprep.subr.mxu0 0.0
        %1599 = vmatpush1.msra.mxu0 0.0
        %1600 = vmatprep.subr.mxu0 0.0
        %1601 = vmatpush1.msra.mxu0 0.0
        %1602 = vmatprep.mubr.f32.mxu0 0.0
        %1603 = vmatmul.mubr.f32.gmra.mrb[0].mxu0 %v1527
        %v1604 = vpop.f32.mrb[0].mxu0
        %v1605 = vadd.f32 0.0, %v1604
        %v1606 = vpop.f32.mrb[0].mxu0
        %1607 = vmatprep.mubr.f32.mxu0 0.0
        %1608 = vmatmul.mubr.f32.gmra.mrb[0].mxu0 %v1530
        %v1609 = vpop.f32.mrb[0].mxu0
        %v1610 = vadd.f32 0.0, %v1609
        %v1611 = vpop.f32.mrb[0].mxu0
        %1612 = vmatprep.mubr.f32.mxu0 0.0
        %1613 = vmatmul.mubr.f32.gmra.mrb[0].mxu0 %v1533
        %v1614 = vpop.f32.mrb[0].mxu0
        %v1615 = vadd.f32 0.0, %v1614
        %v1616 = vpop.f32.mrb[0].mxu0
        %1617 = vmatprep.mubr.f32.mxu0 0.0
        %1618 = vmatmul.mubr.f32.gmra.mrb[0].mxu0 %v1536
        %v1619 = vpop.f32.mrb[0].mxu0
        %v1620 = vadd.f32 0.0, %v1619
        %v1621 = vpop.f32.mrb[0].mxu0
        %1622 = vdwg.mxu0
        %v1623 = vld [vmem:[#allocation8] sm:$0xff]
        %v1624 = vld [vmem:[#allocation8 + $0x8] sm:$0xff]
        %v1625 = vld [vmem:[#allocation8 + $0x10] sm:$0xff]
        %v1626 = vld [vmem:[#allocation8 + $0x18] sm:$0xff]
        %v1627 = vld [vmem:[#allocation8 + $0x20] sm:$0xff]
        %v1628 = vld [vmem:[#allocation8 + $0x28] sm:$0xff]
        %v1629 = vld [vmem:[#allocation8 + $0x30] sm:$0xff]
        %v1630 = vld [vmem:[#allocation8 + $0x38] sm:$0xff]
        %v1631 = vld [vmem:[#allocation8 + $0x40] sm:$0xff]
        %v1632 = vld [vmem:[#allocation8 + $0x48] sm:$0xff]
        %v1633 = vld [vmem:[#allocation8 + $0x50] sm:$0xff]
        %v1634 = vld [vmem:[#allocation8 + $0x58] sm:$0xff]
        %v1635 = vld [vmem:[#allocation8 + $0x60] sm:$0xff]
        %v1636 = vld [vmem:[#allocation8 + $0x68] sm:$0xff]
        %v1637 = vld [vmem:[#allocation8 + $0x70] sm:$0xff]
        %v1638 = vld [vmem:[#allocation8 + $0x78] sm:$0xff]
        %v1639 = vld [vmem:[#allocation8 + $0x80] sm:$0xff]
        %v1640 = vld [vmem:[#allocation8 + $0x88] sm:$0xff]
        %v1641 = vld [vmem:[#allocation8 + $0x90] sm:$0xff]
        %v1642 = vld [vmem:[#allocation8 + $0x98] sm:$0xff]
        %v1643 = vld [vmem:[#allocation8 + $0xa0] sm:$0xff]
        %v1644 = vld [vmem:[#allocation8 + $0xa8] sm:$0xff]
        %v1645 = vld [vmem:[#allocation8 + $0xb0] sm:$0xff]
        %v1646 = vld [vmem:[#allocation8 + $0xb8] sm:$0xff]
        %v1647 = vld [vmem:[#allocation8 + $0xc0] sm:$0xff]
        %v1648 = vld [vmem:[#allocation8 + $0xc8] sm:$0xff]
        %v1649 = vld [vmem:[#allocation8 + $0xd0] sm:$0xff]
        %v1650 = vld [vmem:[#allocation8 + $0xd8] sm:$0xff]
        %v1651 = vld [vmem:[#allocation8 + $0xe0] sm:$0xff]
        %v1652 = vld [vmem:[#allocation8 + $0xe8] sm:$0xff]
        %v1653 = vld [vmem:[#allocation8 + $0xf0] sm:$0xff]
        %v1654 = vld [vmem:[#allocation8 + $0xf8] sm:$0xff]
        %1655 = vmatprep.subr.mxu0 %v1624
        %1656 = vmatpush1.msra.mxu0 %v1623
        %1657 = vmatprep.subr.mxu0 %v1626
        %1658 = vmatpush1.msra.mxu0 %v1625
        %1659 = vmatprep.subr.mxu0 %v1628
        %1660 = vmatpush1.msra.mxu0 %v1627
        %1661 = vmatprep.subr.mxu0 %v1630
        %1662 = vmatpush1.msra.mxu0 %v1629
        %1663 = vmatprep.subr.mxu0 %v1632
        %1664 = vmatpush1.msra.mxu0 %v1631
        %1665 = vmatprep.subr.mxu0 %v1634
        %1666 = vmatpush1.msra.mxu0 %v1633
        %1667 = vmatprep.subr.mxu0 %v1636
        %1668 = vmatpush1.msra.mxu0 %v1635
        %1669 = vmatprep.subr.mxu0 %v1638
        %1670 = vmatpush1.msra.mxu0 %v1637
        %1671 = vmatprep.subr.mxu0 %v1640
        %1672 = vmatpush1.msra.mxu0 %v1639
        %1673 = vmatprep.subr.mxu0 %v1642
        %1674 = vmatpush1.msra.mxu0 %v1641
        %1675 = vmatprep.subr.mxu0 %v1644
        %1676 = vmatpush1.msra.mxu0 %v1643
        %1677 = vmatprep.subr.mxu0 %v1646
        %1678 = vmatpush1.msra.mxu0 %v1645
        %1679 = vmatprep.subr.mxu0 %v1648
        %1680 = vmatpush1.msra.mxu0 %v1647
        %1681 = vmatprep.subr.mxu0 %v1650
        %1682 = vmatpush1.msra.mxu0 %v1649
        %1683 = vmatprep.subr.mxu0 %v1652
        %1684 = vmatpush1.msra.mxu0 %v1651
        %1685 = vmatprep.subr.mxu0 %v1654
        %1686 = vmatpush1.msra.mxu0 %v1653
        %1687 = vmatprep.subr.mxu0 0.0
        %1688 = vmatpush1.msra.mxu0 0.0
        %1689 = vmatprep.subr.mxu0 0.0
        %1690 = vmatpush1.msra.mxu0 0.0
        %1691 = vmatprep.subr.mxu0 0.0
        %1692 = vmatpush1.msra.mxu0 0.0
        %1693 = vmatprep.subr.mxu0 0.0
        %1694 = vmatpush1.msra.mxu0 0.0
        %1695 = vmatprep.subr.mxu0 0.0
        %1696 = vmatpush1.msra.mxu0 0.0
        %1697 = vmatprep.subr.mxu0 0.0
        %1698 = vmatpush1.msra.mxu0 0.0
        %1699 = vmatprep.subr.mxu0 0.0
        %1700 = vmatpush1.msra.mxu0 0.0
        %1701 = vmatprep.subr.mxu0 0.0
        %1702 = vmatpush1.msra.mxu0 0.0
        %1703 = vmatprep.subr.mxu0 0.0
        %1704 = vmatpush1.msra.mxu0 0.0
        %1705 = vmatprep.subr.mxu0 0.0
        %1706 = vmatpush1.msra.mxu0 0.0
        %1707 = vmatprep.subr.mxu0 0.0
        %1708 = vmatpush1.msra.mxu0 0.0
        %1709 = vmatprep.subr.mxu0 0.0
        %1710 = vmatpush1.msra.mxu0 0.0
        %1711 = vmatprep.subr.mxu0 0.0
        %1712 = vmatpush1.msra.mxu0 0.0
        %1713 = vmatprep.subr.mxu0 0.0
        %1714 = vmatpush1.msra.mxu0 0.0
        %1715 = vmatprep.subr.mxu0 0.0
        %1716 = vmatpush1.msra.mxu0 0.0
        %1717 = vmatprep.subr.mxu0 0.0
        %1718 = vmatpush1.msra.mxu0 0.0
        %1719 = vmatprep.mubr.f32.mxu0 0.0
        %1720 = vmatmul.mubr.f32.gmra.mrb[0].mxu0 %v1605
        %v1721 = vpop.f32.mrb[0].mxu0
        %v1722 = vadd.f32 0.0, %v1721
        %v1723 = vpop.f32.mrb[0].mxu0
        %v1724 = vadd.f32 0.0, %v1723
        %1725 = vmatprep.mubr.f32.mxu0 0.0
        %1726 = vmatmul.mubr.f32.gmra.mrb[0].mxu0 %v1610
        %v1727 = vpop.f32.mrb[0].mxu0
        %v1728 = vadd.f32 0.0, %v1727
        %v1729 = vpop.f32.mrb[0].mxu0
        %v1730 = vadd.f32 0.0, %v1729
        %1731 = vmatprep.mubr.f32.mxu0 0.0
        %1732 = vmatmul.mubr.f32.gmra.mrb[0].mxu0 %v1615
        %v1733 = vpop.f32.mrb[0].mxu0
        %v1734 = vadd.f32 0.0, %v1733
        %v1735 = vpop.f32.mrb[0].mxu0
        %v1736 = vadd.f32 0.0, %v1735
        %1737 = vmatprep.mubr.f32.mxu0 0.0
        %1738 = vmatmul.mubr.f32.gmra.mrb[0].mxu0 %v1620
        %v1739 = vpop.f32.mrb[0].mxu0
        %v1740 = vadd.f32 0.0, %v1739
        %v1741 = vpop.f32.mrb[0].mxu0
        %v1742 = vadd.f32 0.0, %v1741
        %1743 = vdwg.mxu0
        %1744 = vst [vmem:[%s313] sm:$0xff] %v1722
        %1745 = vst [vmem:[%s313 + $0x8] sm:$0xff] %v1724
        %1746 = vst [vmem:[%s313 + $0x10] sm:$0xff] %v1728
        %1747 = vst [vmem:[%s313 + $0x18] sm:$0xff] %v1730
        %1748 = vst [vmem:[%s313 + $0x20] sm:$0xff] %v1734
        %1749 = vst [vmem:[%s313 + $0x28] sm:$0xff] %v1736
        %1750 = vst [vmem:[%s313 + $0x30] sm:$0xff] %v1740
        %1751 = vst [vmem:[%s313 + $0x38] sm:$0xff] %v1742
        %s1752 = sand.u32 %s168, 1
        %s1753 = scalar_lea.sflag [#allocation5], %s1752
        %s1754 = sand.u32 %s168, 1
        %s1755 = smul.addr %s1754, 64
        %s1756 = scalar_lea.vmem [#allocation9], %s1755
        // Predicated region
        $region57: #{tpu_custom_call.1} parent=43 // pred_check
          %p1757 = pneg %p178
        $region58: #{tpu_custom_call.1} parent=43 // pred_check_branch
          %1759 = sbr.rel (%p1757) target = $region60
        $region59: #{tpu_custom_call.1} parent=43 // pred_region
          %s1761 = ssub.s32 1024, 1024
          %1762 = vsyncadd %s1753, %s1761
          %s1763 = smul.addr %s24, 8
          %s1764 = smul.addr %s1763, 128
          %s1765 = scalar_lea.hbm %s6, %s1764
          %s1766 = sshll.u32 %s1756, 4
          %s1767 = int_to_ptr.vmem [resolvable:$true] %s1766
          %1772 = dma.vmem_to_hbm [thread:$0]  %s1767, 1024, %s1765, %s1753, 256, 256, 16
        $region60: #{tpu_custom_call.1} parent=43 // pred_fallthru
          _
      $region44: #{tpu_custom_call.1} parent=5 // pred_fallthru
        _
      %p1773 = scmp.le.s32.totalorder 2, %s19
      // Predicated region
      $region61: #{tpu_custom_call.1} parent=5 // pred_check
        %p1774 = pneg %p1773
      $region62: #{tpu_custom_call.1} parent=5 // pred_check_branch
        %1776 = sbr.rel (%p1774) target = $region64
      $region63: #{tpu_custom_call.1} parent=5 // pred_region
        %s1777 = ssub.s32 %s19, 2
        // Predicated region
        $region65: #{tpu_custom_call.1} parent=63 // pred_check
          %p1778 = pneg %p184
        $region66: #{tpu_custom_call.1} parent=63 // pred_check_branch
          %1780 = sbr.rel (%p1778) target = $region68
        $region67: #{tpu_custom_call.1} parent=63 // pred_region
          %s1781 = sand.u32 %s169, 1
          %s1782 = scalar_lea.sflag [#allocation5], %s1781
          %s1783 = sand.u32 %s169, 1
          %s1784 = smul.addr %s1783, 64
          %s1785 = scalar_lea.vmem [#allocation9], %s1784
          %1786 = dma.done %s1782, 1024
        $region68: #{tpu_custom_call.1} parent=63 // pred_fallthru
          _
      $region64: #{tpu_custom_call.1} parent=5 // pred_fallthru
        _
    $region6: #{tpu_custom_call.1} parent=1 // loop_footer
      %s23 = sadd.s32 1, %s19
    $region7: #{tpu_custom_call.1} parent=1 // loop_footer_branch
      %18 = sbr.rel target = $region3
    $region8: #{tpu_custom_call.1} parent=1 // loop_exit
      _
    %1787 = vsyncpa [#allocation4], 1
    %s1788 = scalar_lea.sflag [#allocation4], 1
    %1789 = vsyncpa %s1788, 1
    %1790 = vsyncpa [#allocation7], 1
    %1791 = vsyncpa [#allocation5], 1
    %s1792 = scalar_lea.sflag [#allocation5], 1
    %1793 = vsyncpa %s1792, 1

</llo_original>
